<compile_context>
chip_gen: v5e
topology: v5e:2x2
jax: 0.10.0
libtpu: 0.0.40
codegen_flags: <defaults>
</compile_context>

<pallas_src>
import functools

import numpy as np
import jax
import jax.numpy as jnp
from jax.experimental import pallas as pl
from jax.experimental.pallas import tpu as pltpu

# ---- module hyper-parameters (mirrors ResnetBlock(dim, dim_out, time_emb_dim, groups)) ----
DIM = 4            # input channels
DIM_OUT = 8        # output channels
GROUPS = 8         # GroupNorm groups (default in the PyTorch module)
TIME_EMB_DIM = 32  # time embedding width
B, H, W = 2, 16, 16
EPS = 1e-5         # nn.GroupNorm default eps


# -------------------------------------------------------------------------
# Fused kernel: one grid step per batch element, everything stays in VMEM.
# -------------------------------------------------------------------------
def fused_resnet_kernel(x_ref, t_ref, masks_ref, mw_ref, mb_ref,
                        w1r_ref, b1r_ref, g1_ref, be1_ref,
                        w2_ref, b2_ref, g2_ref, be2_ref,
                        o_ref,
                        patches_ref,
                        *, groups, hh, ww, eps):
    # x_ref:       (1, Cin, HW)       lane-dense input (flattened NCHW)
    # t_ref:       (1, 1, Temb)       time embedding row
    # masks_ref:   (9, HW)            per-tap validity masks (precomputed)
    # mw_ref:      (2*Cout, Temb)     Linear weight (out, in); mb_ref: (2*Cout, 1)
    # w1r_ref:     (2*Cout, 9*Cin)    [conv1 W ; residual 1x1 W padded to center tap]
    # b1r_ref:     (2*Cout, 1)        [conv1 b ; residual b]
    # w2_ref:      (Cout, 9*Cout)     conv2 weights;  b2_ref: (Cout, 1)
    # g*/be*:      (Cout, 1)          GroupNorm gamma / beta columns
    # o_ref:       (1, Cout, HW)
    # patches_ref: (9*max(Cin,Cout), HW)  VMEM scratch im2col patch matrix
    cin = x_ref.shape[1]
    cout = o_ref.shape[1]
    hw = hh * ww

    x = x_ref[0, :, :]                                  # (Cin, HW)

    # ---- time-MLP: SiLU -> Linear -> per-channel (scale, shift) columns ----
    t = t_ref[0, :, :]                                  # (1, Temb)
    t = t * jax.nn.sigmoid(t)                           # SiLU
    ss = jnp.sum(mw_ref[...] * t, axis=1, keepdims=True) + mb_ref[...]   # (2*Cout, 1)
    scale = ss[:cout, :]
    shift = ss[cout:, :]

    def build_patches(z, c_in):
        # im2col: 9 lane-rolls of the (C, HW) image into the scratch patch
        # matrix (boundary taps zeroed by the precomputed masks).
        for ky in range(3):
            for kx in range(3):
                tap = ky * 3 + kx
                d = (ky - 1) * ww + (kx - 1)            # flat offset of this tap
                shifted = z if d == 0 else pltpu.roll(z, shift=(-d) % hw, axis=1)
                patches_ref[tap * c_in:(tap + 1) * c_in, :] = (
                    shifted * masks_ref[tap:tap + 1, :])
        return patches_ref[0:9 * c_in, :]               # (9*C, HW)

    def group_norm(z, gamma_col, beta_col):
        cpg = cout // groups
        if cpg == 1:
            # configured case (groups == channels): per-channel stats.
            mean = jnp.mean(z, axis=1, keepdims=True)                   # (Cout, 1)
            d = z - mean
            var = jnp.mean(d * d, axis=1, keepdims=True)
        else:
            # general groups: small group-membership matmul on column stats.
            gi = jax.lax.broadcasted_iota(jnp.int32, (cout, cout), 0) // cpg
            gj = jax.lax.broadcasted_iota(jnp.int32, (cout, cout), 1) // cpg
            gmat = (gi == gj).astype(jnp.float32)
            n = float(cpg * hw)
            mean = jnp.dot(gmat, jnp.sum(z, axis=1, keepdims=True),
                           preferred_element_type=jnp.float32) / n
            d = z - mean
            var = jnp.dot(gmat, jnp.sum(d * d, axis=1, keepdims=True),
                          preferred_element_type=jnp.float32) / n
        return d * jax.lax.rsqrt(var + eps) * gamma_col + beta_col

    # ---- block1 conv + residual 1x1 conv in ONE MXU pass ----
    patches = build_patches(x, cin)                     # (9*Cin, HW)
    hr = jnp.dot(w1r_ref[...], patches,
                 preferred_element_type=jnp.float32) + b1r_ref[...]      # (2*Cout, HW)
    h = hr[:cout, :]
    res = hr[cout:, :]                                  # stays resident until the end

    # ---- block1: GroupNorm -> (scale+1)*h + shift -> SiLU ----
    h = group_norm(h, g1_ref[...], be1_ref[...])
    h = h * (scale + 1.0) + shift
    h = h * jax.nn.sigmoid(h)

    # ---- block2: conv -> GroupNorm -> SiLU ----
    patches2 = build_patches(h, cout)                   # (9*Cout, HW)
    h = jnp.dot(w2_ref[...], patches2,
                preferred_element_type=jnp.float32) + b2_ref[...]
    h = group_norm(h, g2_ref[...], be2_ref[...])
    h = h * jax.nn.sigmoid(h)

    # ---- residual add ----
    o_ref[0, :, :] = h + res


def _make_masks(hh, ww):
    # Per-tap validity masks for the implicit zero padding (numpy => baked
    # constant at trace time; no in-kernel iota/compare work).
    hw = hh * ww
    pos = np.arange(hw)
    row, col = pos // ww, pos % ww
    m = np.zeros((9, hw), np.float32)
    for ky in range(3):
        for kx in range(3):
            dy, dx = ky - 1, kx - 1
            valid = ((row + dy >= 0) & (row + dy < hh) &
                     (col + dx >= 0) & (col + dx < ww))
            m[ky * 3 + kx] = valid.astype(np.float32)
    return jnp.asarray(m)


# -------------------------------------------------------------------------
# Wrapper: only free reshapes + tiny parameter repacks; single pallas_call.
# -------------------------------------------------------------------------
@jax.jit
def resnet_block_forward(x_nchw, time_emb, p):
    groups = GROUPS
    bsz, cin, hh, ww = x_nchw.shape
    cout = p["w1"].shape[-1]
    hw = hh * ww
    assert cout % groups == 0, "GroupNorm requires dim_out % groups == 0"

    x_flat = x_nchw.reshape(bsz, cin, hw)        # free: NCHW already (C, H*W)-contiguous
    masks = _make_masks(hh, ww)                  # (9, HW) constant

    col = lambda v: v.reshape(-1, 1)
    # conv weights -> (Cout, 9*Cin) with columns ordered (ky, kx, cin)
    w1_mat = jnp.transpose(p["w1"], (3, 0, 1, 2)).reshape(cout, 9 * cin)
    w2_mat = jnp.transpose(p["w2"], (3, 0, 1, 2)).reshape(cout, 9 * cout)

    # Residual 1x1 conv placed at the center tap (tap 4: dy=dx=0, mask == 1),
    # stacked under conv1 so ONE matmul produces both block1-pre and residual.
    zpad = jnp.zeros((cout, 4 * cin), jnp.float32)
    wres_pad = jnp.concatenate([zpad, p["rw"].astype(jnp.float32), zpad], axis=1)
    w1r = jnp.concatenate([w1_mat, wres_pad], axis=0)       # (2*Cout, 9*Cin)
    b1r = jnp.concatenate([col(p["b1"]), col(p["rb"])], axis=0)  # (2*Cout, 1)

    if time_emb is not None and p.get("mlp_w") is not None:
        t3 = time_emb.reshape(bsz, 1, -1)                    # (B, 1, Temb)
        mw, mb = p["mlp_w"], col(p["mlp_b"])
    else:
        # scale = 0, shift = 0  ==  skipping scale_shift (matches the module)
        t3 = jnp.zeros((bsz, 1, 1), jnp.float32)
        mw = jnp.zeros((2 * cout, 1), jnp.float32)
        mb = jnp.zeros((2 * cout, 1), jnp.float32)
    temb = t3.shape[-1]

    kern = functools.partial(fused_resnet_kernel, groups=groups, hh=hh, ww=ww, eps=EPS)
    rep = lambda i: (0, 0)
    out = pl.pallas_call(
        kern,
        out_shape=jax.ShapeDtypeStruct((bsz, cout, hw), jnp.float32),
        grid=(bsz,),
        in_specs=[
            pl.BlockSpec((1, cin, hw), lambda i: (i, 0, 0)),   # x
            pl.BlockSpec((1, 1, temb), lambda i: (i, 0, 0)),   # time embedding
            pl.BlockSpec((9, hw), rep),                        # boundary masks
            pl.BlockSpec((2 * cout, temb), rep),               # mlp W (out, in)
            pl.BlockSpec((2 * cout, 1), rep),                  # mlp b
            pl.BlockSpec((2 * cout, 9 * cin), rep),            # [conv1 W ; res W]
            pl.BlockSpec((2 * cout, 1), rep),                  # [conv1 b ; res b]
            pl.BlockSpec((cout, 1), rep),                      # gn1 gamma
            pl.BlockSpec((cout, 1), rep),                      # gn1 beta
            pl.BlockSpec((cout, 9 * cout), rep),               # conv2 W
            pl.BlockSpec((cout, 1), rep),                      # conv2 b
            pl.BlockSpec((cout, 1), rep),                      # gn2 gamma
            pl.BlockSpec((cout, 1), rep),                      # gn2 beta
        ],
        out_specs=pl.BlockSpec((1, cout, hw), lambda i: (i, 0, 0)),
        scratch_shapes=[pltpu.VMEM((9 * max(cin, cout), hw), jnp.float32)],  # im2col
        compiler_params=pltpu.CompilerParams(dimension_semantics=("parallel",)),
    )(x_flat, t3, masks, mw, mb,
      w1r, b1r, col(p["g1"]), col(p["be1"]),
      w2_mat, col(p["b2"]), col(p["g2"]), col(p["be2"]))
    return out.reshape(bsz, cout, hh, ww)


# -------------------------------------------------------------------------
# Pure-JAX reference (numerical sanity check)
# -------------------------------------------------------------------------
def ref_forward(x_nchw, t, p, groups=GROUPS):
    x = jnp.transpose(x_nchw, (0, 2, 3, 1))   # NCHW -> NHWC
    cout = p["w1"].shape[-1]

    def conv3(z, w, b):
        y = jax.lax.conv_general_dilated(
            z, w, (1, 1), "SAME", dimension_numbers=("NHWC", "HWIO", "NHWC"))
        return y + b.reshape(1, 1, 1, -1)

    def gn(z, gamma, beta):
        bn, hh, ww, c = z.shape
        zg = z.reshape(bn, hh, ww, groups, c // groups)
        mean = zg.mean(axis=(1, 2, 4), keepdims=True)
        var = ((zg - mean) ** 2).mean(axis=(1, 2, 4), keepdims=True)
        zn = (zg - mean) / jnp.sqrt(var + EPS)
        return zn.reshape(bn, hh, ww, c) * gamma.reshape(1, 1, 1, -1) + beta.reshape(1, 1, 1, -1)

    te = t * jax.nn.sigmoid(t)
    te = te @ p["mlp_w"].T + p["mlp_b"]
    scale, shift = te[:, :cout], te[:, cout:]

    h = conv3(x, p["w1"], p["b1"])
    h = gn(h, p["g1"], p["be1"])
    h = h * (scale[:, None, None, :] + 1.0) + shift[:, None, None, :]
    h = h * jax.nn.sigmoid(h)

    h = conv3(h, p["w2"], p["b2"])
    h = gn(h, p["g2"], p["be2"])
    h = h * jax.nn.sigmoid(h)

    res = jnp.einsum("bhwc,oc->bhwo", x, p["rw"]) + p["rb"].reshape(1, 1, 1, -1)
    return jnp.transpose(h + res, (0, 3, 1, 2))


# -------------------------------------------------------------------------
def make_params(key):
    ks = jax.random.split(key, 12)
    n = lambda k, s: 0.1 * jax.random.normal(k, s, jnp.float32)
    if DIM != DIM_OUT:
        rw = n(ks[10], (DIM_OUT, DIM))
        rb = n(ks[11], (DIM_OUT,))
    else:  # nn.Identity() -> identity 1x1 conv
        rw = jnp.eye(DIM, dtype=jnp.float32)
        rb = jnp.zeros((DIM,), jnp.float32)
    return dict(
        mlp_w=n(ks[0], (2 * DIM_OUT, TIME_EMB_DIM)),   # nn.Linear weight (out, in)
        mlp_b=n(ks[1], (2 * DIM_OUT,)),
        w1=n(ks[2], (3, 3, DIM, DIM_OUT)),             # HWIO
        b1=n(ks[3], (DIM_OUT,)),
        g1=1.0 + n(ks[4], (DIM_OUT,)),
        be1=n(ks[5], (DIM_OUT,)),
        w2=n(ks[6], (3, 3, DIM_OUT, DIM_OUT)),
        b2=n(ks[7], (DIM_OUT,)),
        g2=1.0 + n(ks[8], (DIM_OUT,)),
        be2=n(ks[9], (DIM_OUT,)),
        rw=rw,
        rb=rb,
    )


if __name__ == "__main__":
    key = jax.random.PRNGKey(0)
    kp, kx, kt = jax.random.split(key, 3)
    params = make_params(kp)

    x = jax.random.normal(kx, (B, DIM, H, W), jnp.float32)          # NCHW like PyTorch
    time_emb = jax.random.normal(kt, (B, TIME_EMB_DIM), jnp.float32)

    out = jax.block_until_ready(resnet_block_forward(x, time_emb, params))
    ref = jax.block_until_ready(ref_forward(x, time_emb, params))

    assert out.shape == (B, DIM_OUT, H, W)
    assert jnp.allclose(out, ref, atol=2e-2, rtol=2e-2), "mismatch vs reference"

    print("KERNEL_OK")
</pallas_src>

<mosaic_0001>
module attributes {stable_mosaic.version = 11 : i64} {
  func.func @fused_resnet_kernel(%arg0: i32, %arg1: memref<1x4x256xf32, #tpu.memory_space<vmem>>, %arg2: memref<1x1x32xf32, #tpu.memory_space<vmem>>, %arg3: memref<9x256xf32, #tpu.memory_space<vmem>>, %arg4: memref<16x32xf32, #tpu.memory_space<vmem>>, %arg5: memref<16x1xf32, #tpu.memory_space<vmem>>, %arg6: memref<16x36xf32, #tpu.memory_space<vmem>>, %arg7: memref<16x1xf32, #tpu.memory_space<vmem>>, %arg8: memref<8x1xf32, #tpu.memory_space<vmem>>, %arg9: memref<8x1xf32, #tpu.memory_space<vmem>>, %arg10: memref<8x72xf32, #tpu.memory_space<vmem>>, %arg11: memref<8x1xf32, #tpu.memory_space<vmem>>, %arg12: memref<8x1xf32, #tpu.memory_space<vmem>>, %arg13: memref<8x1xf32, #tpu.memory_space<vmem>>, %arg14: memref<1x8x256xf32, #tpu.memory_space<vmem>>, %arg15: memref<72x256xf32, #tpu.memory_space<vmem>>) attributes {dimension_semantics = [#tpu.dimension_semantics<parallel>], iteration_bounds = array<i64: 2>, scalar_prefetch = 0 : i64, scratch_operands = 1 : i64, tpu.core_type = #tpu.core_type<tc>, window_params = [{transform_indices = @transform_0, window_bounds = array<i64: 1, 4, 256>}, {transform_indices = @transform_1, window_bounds = array<i64: 1, 1, 32>}, {pipeline_mode = #tpu.pipeline_mode<synchronous>, transform_indices = @transform_2, window_bounds = array<i64: 9, 256>}, {pipeline_mode = #tpu.pipeline_mode<synchronous>, transform_indices = @transform_3, window_bounds = array<i64: 16, 32>}, {pipeline_mode = #tpu.pipeline_mode<synchronous>, transform_indices = @transform_4, window_bounds = array<i64: 16, 1>}, {pipeline_mode = #tpu.pipeline_mode<synchronous>, transform_indices = @transform_5, window_bounds = array<i64: 16, 36>}, {pipeline_mode = #tpu.pipeline_mode<synchronous>, transform_indices = @transform_6, window_bounds = array<i64: 16, 1>}, {pipeline_mode = #tpu.pipeline_mode<synchronous>, transform_indices = @transform_7, window_bounds = array<i64: 8, 1>}, {pipeline_mode = #tpu.pipeline_mode<synchronous>, transform_indices = @transform_8, window_bounds = array<i64: 8, 1>}, {pipeline_mode = #tpu.pipeline_mode<synchronous>, transform_indices = @transform_9, window_bounds = array<i64: 8, 72>}, {pipeline_mode = #tpu.pipeline_mode<synchronous>, transform_indices = @transform_10, window_bounds = array<i64: 8, 1>}, {pipeline_mode = #tpu.pipeline_mode<synchronous>, transform_indices = @transform_11, window_bounds = array<i64: 8, 1>}, {pipeline_mode = #tpu.pipeline_mode<synchronous>, transform_indices = @transform_12, window_bounds = array<i64: 8, 1>}, {transform_indices = @transform_13, window_bounds = array<i64: 1, 8, 256>}]} {
    %c0 = arith.constant 0 : index
    %c0_0 = arith.constant 0 : index
    %c0_1 = arith.constant 0 : index
    %0 = vector.load %arg1[%c0, %c0_0, %c0_1] : memref<1x4x256xf32, #tpu.memory_space<vmem>>, vector<1x4x256xf32>
    %1 = vector.shape_cast %0 : vector<1x4x256xf32> to vector<4x256xf32>
    %c0_2 = arith.constant 0 : index
    %c0_3 = arith.constant 0 : index
    %c0_4 = arith.constant 0 : index
    %2 = vector.load %arg2[%c0_2, %c0_3, %c0_4] : memref<1x1x32xf32, #tpu.memory_space<vmem>>, vector<1x1x32xf32>
    %3 = vector.shape_cast %2 : vector<1x1x32xf32> to vector<1x32xf32>
    %4 = arith.negf %3 : vector<1x32xf32>
    %5 = math.exp %4 : vector<1x32xf32>
    %cst = arith.constant 1.000000e+00 : f32
    %6 = vector.broadcast %cst : f32 to vector<1x32xf32>
    %7 = arith.addf %6, %5 : vector<1x32xf32>
    %8 = arith.divf %6, %7 : vector<1x32xf32>
    %9 = arith.mulf %3, %8 : vector<1x32xf32>
    %c0_5 = arith.constant 0 : index
    %c0_6 = arith.constant 0 : index
    %10 = vector.load %arg4[%c0_5, %c0_6] : memref<16x32xf32, #tpu.memory_space<vmem>>, vector<16x32xf32>
    %11 = vector.broadcast %9 : vector<1x32xf32> to vector<16x32xf32>
    %12 = arith.mulf %10, %11 : vector<16x32xf32>
    %cst_7 = arith.constant dense<0.000000e+00> : vector<16xf32>
    %13 = vector.multi_reduction <add>, %12, %cst_7 [1] : vector<16x32xf32> to vector<16xf32>
    %14 = vector.shape_cast %13 : vector<16xf32> to vector<16x1xf32>
    %c0_8 = arith.constant 0 : index
    %c0_9 = arith.constant 0 : index
    %15 = vector.load %arg5[%c0_8, %c0_9] : memref<16x1xf32, #tpu.memory_space<vmem>>, vector<16x1xf32>
    %16 = arith.addf %14, %15 : vector<16x1xf32>
    %17 = vector.extract_strided_slice %16 {offsets = [0, 0], sizes = [8, 1], strides = [1, 1]} : vector<16x1xf32> to vector<8x1xf32>
    %18 = vector.extract_strided_slice %16 {offsets = [8, 0], sizes = [8, 1], strides = [1, 1]} : vector<16x1xf32> to vector<8x1xf32>
    %c17_i32 = arith.constant 17 : i32
    %19 = tpu.dynamic_rotate %1 by %c17_i32 dim 1 : vector<4x256xf32>, i32 -> vector<4x256xf32>
    %c0_10 = arith.constant 0 : index
    %c0_11 = arith.constant 0 : index
    %20 = vector.load %arg3[%c0_10, %c0_11] : memref<9x256xf32, #tpu.memory_space<vmem>>, vector<1x256xf32>
    %21 = vector.broadcast %20 : vector<1x256xf32> to vector<4x256xf32>
    %22 = arith.mulf %19, %21 : vector<4x256xf32>
    %c0_12 = arith.constant 0 : index
    %c0_13 = arith.constant 0 : index
    %23 = vector.load %arg15[%c0_12, %c0_13] : memref<72x256xf32, #tpu.memory_space<vmem>>, vector<4x256xf32>
    tpu.vector_store %arg15[%c0_12, %c0_13], %22 {strides = array<i32>} : memref<72x256xf32, #tpu.memory_space<vmem>>, vector<4x256xf32>,
    %c16_i32 = arith.constant 16 : i32
    %24 = tpu.dynamic_rotate %1 by %c16_i32 dim 1 : vector<4x256xf32>, i32 -> vector<4x256xf32>
    %c1 = arith.constant 1 : index
    %c0_14 = arith.constant 0 : index
    %25 = vector.load %arg3[%c1, %c0_14] : memref<9x256xf32, #tpu.memory_space<vmem>>, vector<1x256xf32>
    %26 = vector.broadcast %25 : vector<1x256xf32> to vector<4x256xf32>
    %27 = arith.mulf %24, %26 : vector<4x256xf32>
    %c4 = arith.constant 4 : index
    %c0_15 = arith.constant 0 : index
    %28 = vector.load %arg15[%c4, %c0_15] : memref<72x256xf32, #tpu.memory_space<vmem>>, vector<4x256xf32>
    tpu.vector_store %arg15[%c4, %c0_15], %27 {strides = array<i32>} : memref<72x256xf32, #tpu.memory_space<vmem>>, vector<4x256xf32>,
    %c15_i32 = arith.constant 15 : i32
    %29 = tpu.dynamic_rotate %1 by %c15_i32 dim 1 : vector<4x256xf32>, i32 -> vector<4x256xf32>
    %c2 = arith.constant 2 : index
    %c0_16 = arith.constant 0 : index
    %30 = vector.load %arg3[%c2, %c0_16] : memref<9x256xf32, #tpu.memory_space<vmem>>, vector<1x256xf32>
    %31 = vector.broadcast %30 : vector<1x256xf32> to vector<4x256xf32>
    %32 = arith.mulf %29, %31 : vector<4x256xf32>
    %c8 = arith.constant 8 : index
    %c0_17 = arith.constant 0 : index
    %33 = vector.load %arg15[%c8, %c0_17] : memref<72x256xf32, #tpu.memory_space<vmem>>, vector<4x256xf32>
    tpu.vector_store %arg15[%c8, %c0_17], %32 {strides = array<i32>} : memref<72x256xf32, #tpu.memory_space<vmem>>, vector<4x256xf32>,
    %c1_i32 = arith.constant 1 : i32
    %34 = tpu.dynamic_rotate %1 by %c1_i32 dim 1 : vector<4x256xf32>, i32 -> vector<4x256xf32>
    %c3 = arith.constant 3 : index
    %c0_18 = arith.constant 0 : index
    %35 = vector.load %arg3[%c3, %c0_18] : memref<9x256xf32, #tpu.memory_space<vmem>>, vector<1x256xf32>
    %36 = vector.broadcast %35 : vector<1x256xf32> to vector<4x256xf32>
    %37 = arith.mulf %34, %36 : vector<4x256xf32>
    %c12 = arith.constant 12 : index
    %c0_19 = arith.constant 0 : index
    %38 = vector.load %arg15[%c12, %c0_19] : memref<72x256xf32, #tpu.memory_space<vmem>>, vector<4x256xf32>
    tpu.vector_store %arg15[%c12, %c0_19], %37 {strides = array<i32>} : memref<72x256xf32, #tpu.memory_space<vmem>>, vector<4x256xf32>,
    %c4_20 = arith.constant 4 : index
    %c0_21 = arith.constant 0 : index
    %39 = vector.load %arg3[%c4_20, %c0_21] : memref<9x256xf32, #tpu.memory_space<vmem>>, vector<1x256xf32>
    %40 = vector.broadcast %39 : vector<1x256xf32> to vector<4x256xf32>
    %41 = arith.mulf %1, %40 : vector<4x256xf32>
    %c16 = arith.constant 16 : index
    %c0_22 = arith.constant 0 : index
    %42 = vector.load %arg15[%c16, %c0_22] : memref<72x256xf32, #tpu.memory_space<vmem>>, vector<4x256xf32>
    tpu.vector_store %arg15[%c16, %c0_22], %41 {strides = array<i32>} : memref<72x256xf32, #tpu.memory_space<vmem>>, vector<4x256xf32>,
    %c255_i32 = arith.constant 255 : i32
    %43 = tpu.dynamic_rotate %1 by %c255_i32 dim 1 : vector<4x256xf32>, i32 -> vector<4x256xf32>
    %c5 = arith.constant 5 : index
    %c0_23 = arith.constant 0 : index
    %44 = vector.load %arg3[%c5, %c0_23] : memref<9x256xf32, #tpu.memory_space<vmem>>, vector<1x256xf32>
    %45 = vector.broadcast %44 : vector<1x256xf32> to vector<4x256xf32>
    %46 = arith.mulf %43, %45 : vector<4x256xf32>
    %c20 = arith.constant 20 : index
    %c0_24 = arith.constant 0 : index
    %47 = vector.load %arg15[%c20, %c0_24] : memref<72x256xf32, #tpu.memory_space<vmem>>, vector<4x256xf32>
    tpu.vector_store %arg15[%c20, %c0_24], %46 {strides = array<i32>} : memref<72x256xf32, #tpu.memory_space<vmem>>, vector<4x256xf32>,
    %c241_i32 = arith.constant 241 : i32
    %48 = tpu.dynamic_rotate %1 by %c241_i32 dim 1 : vector<4x256xf32>, i32 -> vector<4x256xf32>
    %c6 = arith.constant 6 : index
    %c0_25 = arith.constant 0 : index
    %49 = vector.load %arg3[%c6, %c0_25] : memref<9x256xf32, #tpu.memory_space<vmem>>, vector<1x256xf32>
    %50 = vector.broadcast %49 : vector<1x256xf32> to vector<4x256xf32>
    %51 = arith.mulf %48, %50 : vector<4x256xf32>
    %c24 = arith.constant 24 : index
    %c0_26 = arith.constant 0 : index
    %52 = vector.load %arg15[%c24, %c0_26] : memref<72x256xf32, #tpu.memory_space<vmem>>, vector<4x256xf32>
    tpu.vector_store %arg15[%c24, %c0_26], %51 {strides = array<i32>} : memref<72x256xf32, #tpu.memory_space<vmem>>, vector<4x256xf32>,
    %c240_i32 = arith.constant 240 : i32
    %53 = tpu.dynamic_rotate %1 by %c240_i32 dim 1 : vector<4x256xf32>, i32 -> vector<4x256xf32>
    %c7 = arith.constant 7 : index
    %c0_27 = arith.constant 0 : index
    %54 = vector.load %arg3[%c7, %c0_27] : memref<9x256xf32, #tpu.memory_space<vmem>>, vector<1x256xf32>
    %55 = vector.broadcast %54 : vector<1x256xf32> to vector<4x256xf32>
    %56 = arith.mulf %53, %55 : vector<4x256xf32>
    %c28 = arith.constant 28 : index
    %c0_28 = arith.constant 0 : index
    %57 = vector.load %arg15[%c28, %c0_28] : memref<72x256xf32, #tpu.memory_space<vmem>>, vector<4x256xf32>
    tpu.vector_store %arg15[%c28, %c0_28], %56 {strides = array<i32>} : memref<72x256xf32, #tpu.memory_space<vmem>>, vector<4x256xf32>,
    %c239_i32 = arith.constant 239 : i32
    %58 = tpu.dynamic_rotate %1 by %c239_i32 dim 1 : vector<4x256xf32>, i32 -> vector<4x256xf32>
    %c8_29 = arith.constant 8 : index
    %c0_30 = arith.constant 0 : index
    %59 = vector.load %arg3[%c8_29, %c0_30] : memref<9x256xf32, #tpu.memory_space<vmem>>, vector<1x256xf32>
    %60 = vector.broadcast %59 : vector<1x256xf32> to vector<4x256xf32>
    %61 = arith.mulf %58, %60 : vector<4x256xf32>
    %c32 = arith.constant 32 : index
    %c0_31 = arith.constant 0 : index
    %62 = vector.load %arg15[%c32, %c0_31] : memref<72x256xf32, #tpu.memory_space<vmem>>, vector<4x256xf32>
    tpu.vector_store %arg15[%c32, %c0_31], %61 {strides = array<i32>} : memref<72x256xf32, #tpu.memory_space<vmem>>, vector<4x256xf32>,
    %c0_32 = arith.constant 0 : index
    %c0_33 = arith.constant 0 : index
    %63 = vector.load %arg15[%c0_32, %c0_33] : memref<72x256xf32, #tpu.memory_space<vmem>>, vector<36x256xf32>
    %c0_34 = arith.constant 0 : index
    %c0_35 = arith.constant 0 : index
    %64 = vector.load %arg6[%c0_34, %c0_35] : memref<16x36xf32, #tpu.memory_space<vmem>>, vector<16x36xf32>
    %cst_36 = arith.constant dense<0.000000e+00> : vector<16x256xf32>
    %65 = tpu.matmul %64, %63, %cst_36 {dimension_numbers = #tpu.dot_dimension_numbers<[1], [0], [0], [1], [0, 0, 1, 1], [], []>} : vector<16x36xf32>, vector<36x256xf32>, vector<16x256xf32> -> vector<16x256xf32>
    %c0_37 = arith.constant 0 : index
    %c0_38 = arith.constant 0 : index
    %66 = vector.load %arg7[%c0_37, %c0_38] : memref<16x1xf32, #tpu.memory_space<vmem>>, vector<16x1xf32>
    %67 = vector.broadcast %66 : vector<16x1xf32> to vector<16x256xf32>
    %68 = arith.addf %65, %67 : vector<16x256xf32>
    %69 = vector.extract_strided_slice %68 {offsets = [0, 0], sizes = [8, 256], strides = [1, 1]} : vector<16x256xf32> to vector<8x256xf32>
    %70 = vector.extract_strided_slice %68 {offsets = [8, 0], sizes = [8, 256], strides = [1, 1]} : vector<16x256xf32> to vector<8x256xf32>
    %c0_39 = arith.constant 0 : index
    %c0_40 = arith.constant 0 : index
    %71 = vector.load %arg8[%c0_39, %c0_40] : memref<8x1xf32, #tpu.memory_space<vmem>>, vector<8x1xf32>
    %c0_41 = arith.constant 0 : index
    %c0_42 = arith.constant 0 : index
    %72 = vector.load %arg9[%c0_41, %c0_42] : memref<8x1xf32, #tpu.memory_space<vmem>>, vector<8x1xf32>
    %cst_43 = arith.constant dense<0.000000e+00> : vector<8xf32>
    %73 = vector.multi_reduction <add>, %69, %cst_43 [1] : vector<8x256xf32> to vector<8xf32>
    %74 = vector.shape_cast %73 : vector<8xf32> to vector<8x1xf32>
    %cst_44 = arith.constant 2.560000e+02 : f32
    %75 = vector.broadcast %cst_44 : f32 to vector<8x1xf32>
    %76 = arith.divf %74, %75 : vector<8x1xf32>
    %77 = vector.broadcast %76 : vector<8x1xf32> to vector<8x256xf32>
    %78 = arith.subf %69, %77 : vector<8x256xf32>
    %79 = arith.mulf %78, %78 : vector<8x256xf32>
    %cst_45 = arith.constant dense<0.000000e+00> : vector<8xf32>
    %80 = vector.multi_reduction <add>, %79, %cst_45 [1] : vector<8x256xf32> to vector<8xf32>
    %81 = vector.shape_cast %80 : vector<8xf32> to vector<8x1xf32>
    %cst_46 = arith.constant 2.560000e+02 : f32
    %82 = vector.broadcast %cst_46 : f32 to vector<8x1xf32>
    %83 = arith.divf %81, %82 : vector<8x1xf32>
    %cst_47 = arith.constant 9.99999974E-6 : f32
    %84 = vector.broadcast %cst_47 : f32 to vector<8x1xf32>
    %85 = arith.addf %83, %84 : vector<8x1xf32>
    %86 = math.rsqrt %85 : vector<8x1xf32>
    %87 = vector.broadcast %86 : vector<8x1xf32> to vector<8x256xf32>
    %88 = arith.mulf %78, %87 : vector<8x256xf32>
    %89 = vector.broadcast %71 : vector<8x1xf32> to vector<8x256xf32>
    %90 = arith.mulf %88, %89 : vector<8x256xf32>
    %91 = vector.broadcast %72 : vector<8x1xf32> to vector<8x256xf32>
    %92 = arith.addf %90, %91 : vector<8x256xf32>
    %cst_48 = arith.constant 1.000000e+00 : f32
    %93 = vector.broadcast %cst_48 : f32 to vector<8x1xf32>
    %94 = arith.addf %17, %93 : vector<8x1xf32>
    %95 = vector.broadcast %94 : vector<8x1xf32> to vector<8x256xf32>
    %96 = arith.mulf %92, %95 : vector<8x256xf32>
    %97 = vector.broadcast %18 : vector<8x1xf32> to vector<8x256xf32>
    %98 = arith.addf %96, %97 : vector<8x256xf32>
    %99 = arith.negf %98 : vector<8x256xf32>
    %100 = math.exp %99 : vector<8x256xf32>
    %cst_49 = arith.constant 1.000000e+00 : f32
    %101 = vector.broadcast %cst_49 : f32 to vector<8x256xf32>
    %102 = arith.addf %101, %100 : vector<8x256xf32>
    %103 = arith.divf %101, %102 : vector<8x256xf32>
    %104 = arith.mulf %98, %103 : vector<8x256xf32>
    %c17_i32_50 = arith.constant 17 : i32
    %105 = tpu.dynamic_rotate %104 by %c17_i32_50 dim 1 : vector<8x256xf32>, i32 -> vector<8x256xf32>
    %c0_51 = arith.constant 0 : index
    %c0_52 = arith.constant 0 : index
    %106 = vector.load %arg3[%c0_51, %c0_52] : memref<9x256xf32, #tpu.memory_space<vmem>>, vector<1x256xf32>
    %107 = vector.broadcast %106 : vector<1x256xf32> to vector<8x256xf32>
    %108 = arith.mulf %105, %107 : vector<8x256xf32>
    %c0_53 = arith.constant 0 : index
    %c0_54 = arith.constant 0 : index
    %109 = vector.load %arg15[%c0_53, %c0_54] : memref<72x256xf32, #tpu.memory_space<vmem>>, vector<8x256xf32>
    tpu.vector_store %arg15[%c0_53, %c0_54], %108 {strides = array<i32>} : memref<72x256xf32, #tpu.memory_space<vmem>>, vector<8x256xf32>,
    %c16_i32_55 = arith.constant 16 : i32
    %110 = tpu.dynamic_rotate %104 by %c16_i32_55 dim 1 : vector<8x256xf32>, i32 -> vector<8x256xf32>
    %c1_56 = arith.constant 1 : index
    %c0_57 = arith.constant 0 : index
    %111 = vector.load %arg3[%c1_56, %c0_57] : memref<9x256xf32, #tpu.memory_space<vmem>>, vector<1x256xf32>
    %112 = vector.broadcast %111 : vector<1x256xf32> to vector<8x256xf32>
    %113 = arith.mulf %110, %112 : vector<8x256xf32>
    %c8_58 = arith.constant 8 : index
    %c0_59 = arith.constant 0 : index
    %114 = vector.load %arg15[%c8_58, %c0_59] : memref<72x256xf32, #tpu.memory_space<vmem>>, vector<8x256xf32>
    tpu.vector_store %arg15[%c8_58, %c0_59], %113 {strides = array<i32>} : memref<72x256xf32, #tpu.memory_space<vmem>>, vector<8x256xf32>,
    %c15_i32_60 = arith.constant 15 : i32
    %115 = tpu.dynamic_rotate %104 by %c15_i32_60 dim 1 : vector<8x256xf32>, i32 -> vector<8x256xf32>
    %c2_61 = arith.constant 2 : index
    %c0_62 = arith.constant 0 : index
    %116 = vector.load %arg3[%c2_61, %c0_62] : memref<9x256xf32, #tpu.memory_space<vmem>>, vector<1x256xf32>
    %117 = vector.broadcast %116 : vector<1x256xf32> to vector<8x256xf32>
    %118 = arith.mulf %115, %117 : vector<8x256xf32>
    %c16_63 = arith.constant 16 : index
    %c0_64 = arith.constant 0 : index
    %119 = vector.load %arg15[%c16_63, %c0_64] : memref<72x256xf32, #tpu.memory_space<vmem>>, vector<8x256xf32>
    tpu.vector_store %arg15[%c16_63, %c0_64], %118 {strides = array<i32>} : memref<72x256xf32, #tpu.memory_space<vmem>>, vector<8x256xf32>,
    %c1_i32_65 = arith.constant 1 : i32
    %120 = tpu.dynamic_rotate %104 by %c1_i32_65 dim 1 : vector<8x256xf32>, i32 -> vector<8x256xf32>
    %c3_66 = arith.constant 3 : index
    %c0_67 = arith.constant 0 : index
    %121 = vector.load %arg3[%c3_66, %c0_67] : memref<9x256xf32, #tpu.memory_space<vmem>>, vector<1x256xf32>
    %122 = vector.broadcast %121 : vector<1x256xf32> to vector<8x256xf32>
    %123 = arith.mulf %120, %122 : vector<8x256xf32>
    %c24_68 = arith.constant 24 : index
    %c0_69 = arith.constant 0 : index
    %124 = vector.load %arg15[%c24_68, %c0_69] : memref<72x256xf32, #tpu.memory_space<vmem>>, vector<8x256xf32>
    tpu.vector_store %arg15[%c24_68, %c0_69], %123 {strides = array<i32>} : memref<72x256xf32, #tpu.memory_space<vmem>>, vector<8x256xf32>,
    %c4_70 = arith.constant 4 : index
    %c0_71 = arith.constant 0 : index
    %125 = vector.load %arg3[%c4_70, %c0_71] : memref<9x256xf32, #tpu.memory_space<vmem>>, vector<1x256xf32>
    %126 = vector.broadcast %125 : vector<1x256xf32> to vector<8x256xf32>
    %127 = arith.mulf %104, %126 : vector<8x256xf32>
    %c32_72 = arith.constant 32 : index
    %c0_73 = arith.constant 0 : index
    %128 = vector.load %arg15[%c32_72, %c0_73] : memref<72x256xf32, #tpu.memory_space<vmem>>, vector<8x256xf32>
    tpu.vector_store %arg15[%c32_72, %c0_73], %127 {strides = array<i32>} : memref<72x256xf32, #tpu.memory_space<vmem>>, vector<8x256xf32>,
    %c255_i32_74 = arith.constant 255 : i32
    %129 = tpu.dynamic_rotate %104 by %c255_i32_74 dim 1 : vector<8x256xf32>, i32 -> vector<8x256xf32>
    %c5_75 = arith.constant 5 : index
    %c0_76 = arith.constant 0 : index
    %130 = vector.load %arg3[%c5_75, %c0_76] : memref<9x256xf32, #tpu.memory_space<vmem>>, vector<1x256xf32>
    %131 = vector.broadcast %130 : vector<1x256xf32> to vector<8x256xf32>
    %132 = arith.mulf %129, %131 : vector<8x256xf32>
    %c40 = arith.constant 40 : index
    %c0_77 = arith.constant 0 : index
    %133 = vector.load %arg15[%c40, %c0_77] : memref<72x256xf32, #tpu.memory_space<vmem>>, vector<8x256xf32>
    tpu.vector_store %arg15[%c40, %c0_77], %132 {strides = array<i32>} : memref<72x256xf32, #tpu.memory_space<vmem>>, vector<8x256xf32>,
    %c241_i32_78 = arith.constant 241 : i32
    %134 = tpu.dynamic_rotate %104 by %c241_i32_78 dim 1 : vector<8x256xf32>, i32 -> vector<8x256xf32>
    %c6_79 = arith.constant 6 : index
    %c0_80 = arith.constant 0 : index
    %135 = vector.load %arg3[%c6_79, %c0_80] : memref<9x256xf32, #tpu.memory_space<vmem>>, vector<1x256xf32>
    %136 = vector.broadcast %135 : vector<1x256xf32> to vector<8x256xf32>
    %137 = arith.mulf %134, %136 : vector<8x256xf32>
    %c48 = arith.constant 48 : index
    %c0_81 = arith.constant 0 : index
    %138 = vector.load %arg15[%c48, %c0_81] : memref<72x256xf32, #tpu.memory_space<vmem>>, vector<8x256xf32>
    tpu.vector_store %arg15[%c48, %c0_81], %137 {strides = array<i32>} : memref<72x256xf32, #tpu.memory_space<vmem>>, vector<8x256xf32>,
    %c240_i32_82 = arith.constant 240 : i32
    %139 = tpu.dynamic_rotate %104 by %c240_i32_82 dim 1 : vector<8x256xf32>, i32 -> vector<8x256xf32>
    %c7_83 = arith.constant 7 : index
    %c0_84 = arith.constant 0 : index
    %140 = vector.load %arg3[%c7_83, %c0_84] : memref<9x256xf32, #tpu.memory_space<vmem>>, vector<1x256xf32>
    %141 = vector.broadcast %140 : vector<1x256xf32> to vector<8x256xf32>
    %142 = arith.mulf %139, %141 : vector<8x256xf32>
    %c56 = arith.constant 56 : index
    %c0_85 = arith.constant 0 : index
    %143 = vector.load %arg15[%c56, %c0_85] : memref<72x256xf32, #tpu.memory_space<vmem>>, vector<8x256xf32>
    tpu.vector_store %arg15[%c56, %c0_85], %142 {strides = array<i32>} : memref<72x256xf32, #tpu.memory_space<vmem>>, vector<8x256xf32>,
    %c239_i32_86 = arith.constant 239 : i32
    %144 = tpu.dynamic_rotate %104 by %c239_i32_86 dim 1 : vector<8x256xf32>, i32 -> vector<8x256xf32>
    %c8_87 = arith.constant 8 : index
    %c0_88 = arith.constant 0 : index
    %145 = vector.load %arg3[%c8_87, %c0_88] : memref<9x256xf32, #tpu.memory_space<vmem>>, vector<1x256xf32>
    %146 = vector.broadcast %145 : vector<1x256xf32> to vector<8x256xf32>
    %147 = arith.mulf %144, %146 : vector<8x256xf32>
    %c64 = arith.constant 64 : index
    %c0_89 = arith.constant 0 : index
    %148 = vector.load %arg15[%c64, %c0_89] : memref<72x256xf32, #tpu.memory_space<vmem>>, vector<8x256xf32>
    tpu.vector_store %arg15[%c64, %c0_89], %147 {strides = array<i32>} : memref<72x256xf32, #tpu.memory_space<vmem>>, vector<8x256xf32>,
    %c0_90 = arith.constant 0 : index
    %c0_91 = arith.constant 0 : index
    %149 = vector.load %arg15[%c0_90, %c0_91] : memref<72x256xf32, #tpu.memory_space<vmem>>, vector<72x256xf32>
    %c0_92 = arith.constant 0 : index
    %c0_93 = arith.constant 0 : index
    %150 = vector.load %arg10[%c0_92, %c0_93] : memref<8x72xf32, #tpu.memory_space<vmem>>, vector<8x72xf32>
    %cst_94 = arith.constant dense<0.000000e+00> : vector<8x256xf32>
    %151 = tpu.matmul %150, %149, %cst_94 {dimension_numbers = #tpu.dot_dimension_numbers<[1], [0], [0], [1], [0, 0, 1, 1], [], []>} : vector<8x72xf32>, vector<72x256xf32>, vector<8x256xf32> -> vector<8x256xf32>
    %c0_95 = arith.constant 0 : index
    %c0_96 = arith.constant 0 : index
    %152 = vector.load %arg11[%c0_95, %c0_96] : memref<8x1xf32, #tpu.memory_space<vmem>>, vector<8x1xf32>
    %153 = vector.broadcast %152 : vector<8x1xf32> to vector<8x256xf32>
    %154 = arith.addf %151, %153 : vector<8x256xf32>
    %c0_97 = arith.constant 0 : index
    %c0_98 = arith.constant 0 : index
    %155 = vector.load %arg12[%c0_97, %c0_98] : memref<8x1xf32, #tpu.memory_space<vmem>>, vector<8x1xf32>
    %c0_99 = arith.constant 0 : index
    %c0_100 = arith.constant 0 : index
    %156 = vector.load %arg13[%c0_99, %c0_100] : memref<8x1xf32, #tpu.memory_space<vmem>>, vector<8x1xf32>
    %cst_101 = arith.constant dense<0.000000e+00> : vector<8xf32>
    %157 = vector.multi_reduction <add>, %154, %cst_101 [1] : vector<8x256xf32> to vector<8xf32>
    %158 = vector.shape_cast %157 : vector<8xf32> to vector<8x1xf32>
    %cst_102 = arith.constant 2.560000e+02 : f32
    %159 = vector.broadcast %cst_102 : f32 to vector<8x1xf32>
    %160 = arith.divf %158, %159 : vector<8x1xf32>
    %161 = vector.broadcast %160 : vector<8x1xf32> to vector<8x256xf32>
    %162 = arith.subf %154, %161 : vector<8x256xf32>
    %163 = arith.mulf %162, %162 : vector<8x256xf32>
    %cst_103 = arith.constant dense<0.000000e+00> : vector<8xf32>
    %164 = vector.multi_reduction <add>, %163, %cst_103 [1] : vector<8x256xf32> to vector<8xf32>
    %165 = vector.shape_cast %164 : vector<8xf32> to vector<8x1xf32>
    %cst_104 = arith.constant 2.560000e+02 : f32
    %166 = vector.broadcast %cst_104 : f32 to vector<8x1xf32>
    %167 = arith.divf %165, %166 : vector<8x1xf32>
    %cst_105 = arith.constant 9.99999974E-6 : f32
    %168 = vector.broadcast %cst_105 : f32 to vector<8x1xf32>
    %169 = arith.addf %167, %168 : vector<8x1xf32>
    %170 = math.rsqrt %169 : vector<8x1xf32>
    %171 = vector.broadcast %170 : vector<8x1xf32> to vector<8x256xf32>
    %172 = arith.mulf %162, %171 : vector<8x256xf32>
    %173 = vector.broadcast %155 : vector<8x1xf32> to vector<8x256xf32>
    %174 = arith.mulf %172, %173 : vector<8x256xf32>
    %175 = vector.broadcast %156 : vector<8x1xf32> to vector<8x256xf32>
    %176 = arith.addf %174, %175 : vector<8x256xf32>
    %177 = arith.negf %176 : vector<8x256xf32>
    %178 = math.exp %177 : vector<8x256xf32>
    %cst_106 = arith.constant 1.000000e+00 : f32
    %179 = vector.broadcast %cst_106 : f32 to vector<8x256xf32>
    %180 = arith.addf %179, %178 : vector<8x256xf32>
    %181 = arith.divf %179, %180 : vector<8x256xf32>
    %182 = arith.mulf %176, %181 : vector<8x256xf32>
    %183 = arith.addf %182, %70 : vector<8x256xf32>
    %c0_107 = arith.constant 0 : index
    %c0_108 = arith.constant 0 : index
    %c0_109 = arith.constant 0 : index
    %184 = vector.load %arg14[%c0_107, %c0_108, %c0_109] : memref<1x8x256xf32, #tpu.memory_space<vmem>>, vector<1x8x256xf32>
    %185 = vector.shape_cast %184 : vector<1x8x256xf32> to vector<8x256xf32>
    %186 = vector.shape_cast %183 : vector<8x256xf32> to vector<1x8x256xf32>
    tpu.vector_store %arg14[%c0_107, %c0_108, %c0_109], %186 {strides = array<i32>} : memref<1x8x256xf32, #tpu.memory_space<vmem>>, vector<1x8x256xf32>,
    return
  }
  func.func @transform_0(%arg0: i32) -> (i32, i32, i32) {
    %c0_i32 = arith.constant 0 : i32
    %c0_i32_0 = arith.constant 0 : i32
    %c0_i32_1 = arith.constant 0 : i32
    return %arg0, %c0_i32, %c0_i32_0 : i32, i32, i32
  }
  func.func @transform_1(%arg0: i32) -> (i32, i32, i32) {
    %c0_i32 = arith.constant 0 : i32
    %c0_i32_0 = arith.constant 0 : i32
    %c0_i32_1 = arith.constant 0 : i32
    return %arg0, %c0_i32, %c0_i32_0 : i32, i32, i32
  }
  func.func @transform_2(%arg0: i32) -> (i32, i32) {
    %c0_i32 = arith.constant 0 : i32
    %c0_i32_0 = arith.constant 0 : i32
    %c0_i32_1 = arith.constant 0 : i32
    return %c0_i32, %c0_i32_0 : i32, i32
  }
  func.func @transform_3(%arg0: i32) -> (i32, i32) {
    %c0_i32 = arith.constant 0 : i32
    %c0_i32_0 = arith.constant 0 : i32
    %c0_i32_1 = arith.constant 0 : i32
    return %c0_i32, %c0_i32_0 : i32, i32
  }
  func.func @transform_4(%arg0: i32) -> (i32, i32) {
    %c0_i32 = arith.constant 0 : i32
    %c0_i32_0 = arith.constant 0 : i32
    %c0_i32_1 = arith.constant 0 : i32
    return %c0_i32, %c0_i32_0 : i32, i32
  }
  func.func @transform_5(%arg0: i32) -> (i32, i32) {
    %c0_i32 = arith.constant 0 : i32
    %c0_i32_0 = arith.constant 0 : i32
    %c0_i32_1 = arith.constant 0 : i32
    return %c0_i32, %c0_i32_0 : i32, i32
  }
  func.func @transform_6(%arg0: i32) -> (i32, i32) {
    %c0_i32 = arith.constant 0 : i32
    %c0_i32_0 = arith.constant 0 : i32
    %c0_i32_1 = arith.constant 0 : i32
    return %c0_i32, %c0_i32_0 : i32, i32
  }
  func.func @transform_7(%arg0: i32) -> (i32, i32) {
    %c0_i32 = arith.constant 0 : i32
    %c0_i32_0 = arith.constant 0 : i32
    %c0_i32_1 = arith.constant 0 : i32
    return %c0_i32, %c0_i32_0 : i32, i32
  }
  func.func @transform_8(%arg0: i32) -> (i32, i32) {
    %c0_i32 = arith.constant 0 : i32
    %c0_i32_0 = arith.constant 0 : i32
    %c0_i32_1 = arith.constant 0 : i32
    return %c0_i32, %c0_i32_0 : i32, i32
  }
  func.func @transform_9(%arg0: i32) -> (i32, i32) {
    %c0_i32 = arith.constant 0 : i32
    %c0_i32_0 = arith.constant 0 : i32
    %c0_i32_1 = arith.constant 0 : i32
    return %c0_i32, %c0_i32_0 : i32, i32
  }
  func.func @transform_10(%arg0: i32) -> (i32, i32) {
    %c0_i32 = arith.constant 0 : i32
    %c0_i32_0 = arith.constant 0 : i32
    %c0_i32_1 = arith.constant 0 : i32
    return %c0_i32, %c0_i32_0 : i32, i32
  }
  func.func @transform_11(%arg0: i32) -> (i32, i32) {
    %c0_i32 = arith.constant 0 : i32
    %c0_i32_0 = arith.constant 0 : i32
    %c0_i32_1 = arith.constant 0 : i32
    return %c0_i32, %c0_i32_0 : i32, i32
  }
  func.func @transform_12(%arg0: i32) -> (i32, i32) {
    %c0_i32 = arith.constant 0 : i32
    %c0_i32_0 = arith.constant 0 : i32
    %c0_i32_1 = arith.constant 0 : i32
    return %c0_i32, %c0_i32_0 : i32, i32
  }
  func.func @transform_13(%arg0: i32) -> (i32, i32, i32) {
    %c0_i32 = arith.constant 0 : i32
    %c0_i32_0 = arith.constant 0 : i32
    %c0_i32_1 = arith.constant 0 : i32
    return %arg0, %c0_i32, %c0_i32_0 : i32, i32, i32
  }
}

</mosaic_0001>

<llo_original>
// kernel: resnet_block_forward.1
$region0: #{resnet_block_forward.1}
  #allocation0 [shape = 'u32[]', space=smem, size = 0x4, offset = 0x4, fixed_abs, tag = 'smem constant byte address 0x4 - core index']
  #allocation1 [shape = 'u32[72,128]{1,0:T(1,128)}', space=vmem, size = 0x9000, scoped, tag = 'internal scratch']
  #allocation2 [shape = 'f32[72,256]{1,0:T(8,128)}', space=vmem, size = 0x12000, scoped, tag = 'scratch operand']
  %s0 = inlined_call_operand.vmem [shape: f32[2,4,256], index: 0, kind: input, shape index: {}]
  %s1 = inlined_call_operand.vmem [shape: f32[2,1,32], index: 1, kind: input, shape index: {}]
  %s2 = inlined_call_operand.vmem [shape: f32[9,256], index: 2, kind: input, shape index: {}]
  %s3 = inlined_call_operand.vmem [shape: f32[16,32], index: 3, kind: input, shape index: {}]
  %s4 = inlined_call_operand.vmem [shape: f32[16,1], index: 4, kind: input, shape index: {}]
  %s5 = inlined_call_operand.vmem [shape: f32[16,36], index: 5, kind: input, shape index: {}]
  %s6 = inlined_call_operand.vmem [shape: f32[16,1], index: 6, kind: input, shape index: {}]
  %s7 = inlined_call_operand.vmem [shape: f32[8,1], index: 7, kind: input, shape index: {}]
  %s8 = inlined_call_operand.vmem [shape: f32[8,1], index: 8, kind: input, shape index: {}]
  %s9 = inlined_call_operand.vmem [shape: f32[8,72], index: 9, kind: input, shape index: {}]
  %s10 = inlined_call_operand.vmem [shape: f32[8,1], index: 10, kind: input, shape index: {}]
  %s11 = inlined_call_operand.vmem [shape: f32[8,1], index: 11, kind: input, shape index: {}]
  %s12 = inlined_call_operand.vmem [shape: f32[8,1], index: 12, kind: input, shape index: {}]
  %s13 = inlined_call_operand.vmem [shape: f32[2,8,256], index: 13, kind: output, shape index: {}]
  %s14 = sld [smem:[#allocation0]]
  $region85: #{resnet_block_forward.1} parent=0
    _
  %s16 = ssub.s32 1, %s14
  %s17 = scalar_select 0, %s16, %s14
  loop: start=0, step=1, limit=4
  $region2: #{resnet_block_forward.1} parent=0 // loop_pre_header
    _
  $region3: #{resnet_block_forward.1} parent=0 // loop_header
    %s19 = sphi 0, %s23
    %p20 = scmp.ge.s32.totalorder %s19, 4
    %s29 = sphi 0, %s31
    %s32 = sphi 0, %s29
    %s33 = sphi 0, %s32
    %s49 = sphi 0, %s33
    %s55 = sphi 0, %s57
    %s58 = sphi 0, %s55
    %s59 = sphi 0, %s58
    %s75 = sphi 0, %s59
    %s79 = sphi 0, %s79
    %s81 = sphi 0, %s79
    %s82 = sphi 0, %s81
    %s96 = sphi 0, %s82
    %s100 = sphi 0, %s100
    %s102 = sphi 0, %s100
    %s103 = sphi 0, %s102
    %s117 = sphi 0, %s103
    %s121 = sphi 0, %s121
    %s123 = sphi 0, %s121
    %s124 = sphi 0, %s123
    %s138 = sphi 0, %s124
    %s142 = sphi 0, %s142
    %s144 = sphi 0, %s142
    %s145 = sphi 0, %s144
    %s159 = sphi 0, %s145
    %s163 = sphi 0, %s163
    %s165 = sphi 0, %s163
    %s166 = sphi 0, %s165
    %s180 = sphi 0, %s166
    %s184 = sphi 0, %s184
    %s186 = sphi 0, %s184
    %s187 = sphi 0, %s186
    %s201 = sphi 0, %s187
    %s205 = sphi 0, %s205
    %s207 = sphi 0, %s205
    %s208 = sphi 0, %s207
    %s222 = sphi 0, %s208
    %s226 = sphi 0, %s226
    %s228 = sphi 0, %s226
    %s229 = sphi 0, %s228
    %s243 = sphi 0, %s229
    %s247 = sphi 0, %s247
    %s249 = sphi 0, %s247
    %s250 = sphi 0, %s249
    %s264 = sphi 0, %s250
    %s268 = sphi 0, %s268
    %s270 = sphi 0, %s268
    %s271 = sphi 0, %s270
    %s285 = sphi 0, %s271
    %s289 = sphi 0, %s289
    %s291 = sphi 0, %s289
    %s292 = sphi 0, %s291
    %s306 = sphi 0, %s292
    %s312 = sphi 0, %s314
    %s315 = sphi 0, %s312
    %s316 = sphi 0, %s315
    %s332 = sphi 0, %s316
  $region4: #{resnet_block_forward.1} parent=0 // loop_header_branch
    %22 = sbr.rel (%p20) target = $region8
  $region5: #{resnet_block_forward.1} parent=0 // loop_body
    %s24 = ssub.s32 %s19, 1
    %s25 = ssub.s32 %s19, 2
    %s26 = sadd.s32 %s19, 1
    %s27 = ssub.s32 %s19, %s26
    %p28 = scmp.eq.s32.totalorder %s27, 0
    %s30 = sadd.s32 %s29, 1
    %s31 = scalar_select %p28, %s29, %s30
    %p34 = pneg %p28
    %p35 = scmp.eq.s32.totalorder %s19, 1
    %p36 = por %p34, %p35
    %p37 = scmp.ne.s32.totalorder %s29, %s32
    %p38 = scmp.eq.s32.totalorder %s19, 0
    %p39 = por %p37, %p38
    %p40 = scmp.ne.s32.totalorder %s29, %s32
    %p41 = scmp.eq.s32.totalorder %s24, 1
    %p42 = por %p40, %p41
    %p43 = scmp.ne.s32.totalorder %s32, %s33
    %p44 = scmp.eq.s32.totalorder %s24, 0
    %p45 = por %p43, %p44
    %p46 = scmp.ne.s32.totalorder %s32, %s33
    %p47 = scmp.eq.s32.totalorder %s25, 1
    %p48 = por %p46, %p47
    %p50 = scmp.ne.s32.totalorder %s33, %s49
    %p51 = scmp.eq.s32.totalorder %s25, 0
    %p52 = por %p50, %p51
    %s53 = ssub.s32 %s19, %s26
    %p54 = scmp.eq.s32.totalorder %s53, 0
    %s56 = sadd.s32 %s55, 1
    %s57 = scalar_select %p54, %s55, %s56
    %p60 = pneg %p54
    %p61 = scmp.eq.s32.totalorder %s19, 1
    %p62 = por %p60, %p61
    %p63 = scmp.ne.s32.totalorder %s55, %s58
    %p64 = scmp.eq.s32.totalorder %s19, 0
    %p65 = por %p63, %p64
    %p66 = scmp.ne.s32.totalorder %s55, %s58
    %p67 = scmp.eq.s32.totalorder %s24, 1
    %p68 = por %p66, %p67
    %p69 = scmp.ne.s32.totalorder %s58, %s59
    %p70 = scmp.eq.s32.totalorder %s24, 0
    %p71 = por %p69, %p70
    %p72 = scmp.ne.s32.totalorder %s58, %s59
    %p73 = scmp.eq.s32.totalorder %s25, 1
    %p74 = por %p72, %p73
    %p76 = scmp.ne.s32.totalorder %s59, %s75
    %p77 = scmp.eq.s32.totalorder %s25, 0
    %p78 = por %p76, %p77
    %s80 = sadd.s32 %s79, 1
    %p83 = scmp.eq.s32.totalorder %s19, 1
    %p84 = scmp.ne.s32.totalorder %s79, %s81
    %p85 = scmp.eq.s32.totalorder %s19, 0
    %p86 = por %p84, %p85
    %p87 = scmp.ne.s32.totalorder %s79, %s81
    %p88 = scmp.eq.s32.totalorder %s24, 1
    %p89 = por %p87, %p88
    %p90 = scmp.ne.s32.totalorder %s81, %s82
    %p91 = scmp.eq.s32.totalorder %s24, 0
    %p92 = por %p90, %p91
    %p93 = scmp.ne.s32.totalorder %s81, %s82
    %p94 = scmp.eq.s32.totalorder %s25, 1
    %p95 = por %p93, %p94
    %p97 = scmp.ne.s32.totalorder %s82, %s96
    %p98 = scmp.eq.s32.totalorder %s25, 0
    %p99 = por %p97, %p98
    %s101 = sadd.s32 %s100, 1
    %p104 = scmp.eq.s32.totalorder %s19, 1
    %p105 = scmp.ne.s32.totalorder %s100, %s102
    %p106 = scmp.eq.s32.totalorder %s19, 0
    %p107 = por %p105, %p106
    %p108 = scmp.ne.s32.totalorder %s100, %s102
    %p109 = scmp.eq.s32.totalorder %s24, 1
    %p110 = por %p108, %p109
    %p111 = scmp.ne.s32.totalorder %s102, %s103
    %p112 = scmp.eq.s32.totalorder %s24, 0
    %p113 = por %p111, %p112
    %p114 = scmp.ne.s32.totalorder %s102, %s103
    %p115 = scmp.eq.s32.totalorder %s25, 1
    %p116 = por %p114, %p115
    %p118 = scmp.ne.s32.totalorder %s103, %s117
    %p119 = scmp.eq.s32.totalorder %s25, 0
    %p120 = por %p118, %p119
    %s122 = sadd.s32 %s121, 1
    %p125 = scmp.eq.s32.totalorder %s19, 1
    %p126 = scmp.ne.s32.totalorder %s121, %s123
    %p127 = scmp.eq.s32.totalorder %s19, 0
    %p128 = por %p126, %p127
    %p129 = scmp.ne.s32.totalorder %s121, %s123
    %p130 = scmp.eq.s32.totalorder %s24, 1
    %p131 = por %p129, %p130
    %p132 = scmp.ne.s32.totalorder %s123, %s124
    %p133 = scmp.eq.s32.totalorder %s24, 0
    %p134 = por %p132, %p133
    %p135 = scmp.ne.s32.totalorder %s123, %s124
    %p136 = scmp.eq.s32.totalorder %s25, 1
    %p137 = por %p135, %p136
    %p139 = scmp.ne.s32.totalorder %s124, %s138
    %p140 = scmp.eq.s32.totalorder %s25, 0
    %p141 = por %p139, %p140
    %s143 = sadd.s32 %s142, 1
    %p146 = scmp.eq.s32.totalorder %s19, 1
    %p147 = scmp.ne.s32.totalorder %s142, %s144
    %p148 = scmp.eq.s32.totalorder %s19, 0
    %p149 = por %p147, %p148
    %p150 = scmp.ne.s32.totalorder %s142, %s144
    %p151 = scmp.eq.s32.totalorder %s24, 1
    %p152 = por %p150, %p151
    %p153 = scmp.ne.s32.totalorder %s144, %s145
    %p154 = scmp.eq.s32.totalorder %s24, 0
    %p155 = por %p153, %p154
    %p156 = scmp.ne.s32.totalorder %s144, %s145
    %p157 = scmp.eq.s32.totalorder %s25, 1
    %p158 = por %p156, %p157
    %p160 = scmp.ne.s32.totalorder %s145, %s159
    %p161 = scmp.eq.s32.totalorder %s25, 0
    %p162 = por %p160, %p161
    %s164 = sadd.s32 %s163, 1
    %p167 = scmp.eq.s32.totalorder %s19, 1
    %p168 = scmp.ne.s32.totalorder %s163, %s165
    %p169 = scmp.eq.s32.totalorder %s19, 0
    %p170 = por %p168, %p169
    %p171 = scmp.ne.s32.totalorder %s163, %s165
    %p172 = scmp.eq.s32.totalorder %s24, 1
    %p173 = por %p171, %p172
    %p174 = scmp.ne.s32.totalorder %s165, %s166
    %p175 = scmp.eq.s32.totalorder %s24, 0
    %p176 = por %p174, %p175
    %p177 = scmp.ne.s32.totalorder %s165, %s166
    %p178 = scmp.eq.s32.totalorder %s25, 1
    %p179 = por %p177, %p178
    %p181 = scmp.ne.s32.totalorder %s166, %s180
    %p182 = scmp.eq.s32.totalorder %s25, 0
    %p183 = por %p181, %p182
    %s185 = sadd.s32 %s184, 1
    %p188 = scmp.eq.s32.totalorder %s19, 1
    %p189 = scmp.ne.s32.totalorder %s184, %s186
    %p190 = scmp.eq.s32.totalorder %s19, 0
    %p191 = por %p189, %p190
    %p192 = scmp.ne.s32.totalorder %s184, %s186
    %p193 = scmp.eq.s32.totalorder %s24, 1
    %p194 = por %p192, %p193
    %p195 = scmp.ne.s32.totalorder %s186, %s187
    %p196 = scmp.eq.s32.totalorder %s24, 0
    %p197 = por %p195, %p196
    %p198 = scmp.ne.s32.totalorder %s186, %s187
    %p199 = scmp.eq.s32.totalorder %s25, 1
    %p200 = por %p198, %p199
    %p202 = scmp.ne.s32.totalorder %s187, %s201
    %p203 = scmp.eq.s32.totalorder %s25, 0
    %p204 = por %p202, %p203
    %s206 = sadd.s32 %s205, 1
    %p209 = scmp.eq.s32.totalorder %s19, 1
    %p210 = scmp.ne.s32.totalorder %s205, %s207
    %p211 = scmp.eq.s32.totalorder %s19, 0
    %p212 = por %p210, %p211
    %p213 = scmp.ne.s32.totalorder %s205, %s207
    %p214 = scmp.eq.s32.totalorder %s24, 1
    %p215 = por %p213, %p214
    %p216 = scmp.ne.s32.totalorder %s207, %s208
    %p217 = scmp.eq.s32.totalorder %s24, 0
    %p218 = por %p216, %p217
    %p219 = scmp.ne.s32.totalorder %s207, %s208
    %p220 = scmp.eq.s32.totalorder %s25, 1
    %p221 = por %p219, %p220
    %p223 = scmp.ne.s32.totalorder %s208, %s222
    %p224 = scmp.eq.s32.totalorder %s25, 0
    %p225 = por %p223, %p224
    %s227 = sadd.s32 %s226, 1
    %p230 = scmp.eq.s32.totalorder %s19, 1
    %p231 = scmp.ne.s32.totalorder %s226, %s228
    %p232 = scmp.eq.s32.totalorder %s19, 0
    %p233 = por %p231, %p232
    %p234 = scmp.ne.s32.totalorder %s226, %s228
    %p235 = scmp.eq.s32.totalorder %s24, 1
    %p236 = por %p234, %p235
    %p237 = scmp.ne.s32.totalorder %s228, %s229
    %p238 = scmp.eq.s32.totalorder %s24, 0
    %p239 = por %p237, %p238
    %p240 = scmp.ne.s32.totalorder %s228, %s229
    %p241 = scmp.eq.s32.totalorder %s25, 1
    %p242 = por %p240, %p241
    %p244 = scmp.ne.s32.totalorder %s229, %s243
    %p245 = scmp.eq.s32.totalorder %s25, 0
    %p246 = por %p244, %p245
    %s248 = sadd.s32 %s247, 1
    %p251 = scmp.eq.s32.totalorder %s19, 1
    %p252 = scmp.ne.s32.totalorder %s247, %s249
    %p253 = scmp.eq.s32.totalorder %s19, 0
    %p254 = por %p252, %p253
    %p255 = scmp.ne.s32.totalorder %s247, %s249
    %p256 = scmp.eq.s32.totalorder %s24, 1
    %p257 = por %p255, %p256
    %p258 = scmp.ne.s32.totalorder %s249, %s250
    %p259 = scmp.eq.s32.totalorder %s24, 0
    %p260 = por %p258, %p259
    %p261 = scmp.ne.s32.totalorder %s249, %s250
    %p262 = scmp.eq.s32.totalorder %s25, 1
    %p263 = por %p261, %p262
    %p265 = scmp.ne.s32.totalorder %s250, %s264
    %p266 = scmp.eq.s32.totalorder %s25, 0
    %p267 = por %p265, %p266
    %s269 = sadd.s32 %s268, 1
    %p272 = scmp.eq.s32.totalorder %s19, 1
    %p273 = scmp.ne.s32.totalorder %s268, %s270
    %p274 = scmp.eq.s32.totalorder %s19, 0
    %p275 = por %p273, %p274
    %p276 = scmp.ne.s32.totalorder %s268, %s270
    %p277 = scmp.eq.s32.totalorder %s24, 1
    %p278 = por %p276, %p277
    %p279 = scmp.ne.s32.totalorder %s270, %s271
    %p280 = scmp.eq.s32.totalorder %s24, 0
    %p281 = por %p279, %p280
    %p282 = scmp.ne.s32.totalorder %s270, %s271
    %p283 = scmp.eq.s32.totalorder %s25, 1
    %p284 = por %p282, %p283
    %p286 = scmp.ne.s32.totalorder %s271, %s285
    %p287 = scmp.eq.s32.totalorder %s25, 0
    %p288 = por %p286, %p287
    %s290 = sadd.s32 %s289, 1
    %p293 = scmp.eq.s32.totalorder %s19, 1
    %p294 = scmp.ne.s32.totalorder %s289, %s291
    %p295 = scmp.eq.s32.totalorder %s19, 0
    %p296 = por %p294, %p295
    %p297 = scmp.ne.s32.totalorder %s289, %s291
    %p298 = scmp.eq.s32.totalorder %s24, 1
    %p299 = por %p297, %p298
    %p300 = scmp.ne.s32.totalorder %s291, %s292
    %p301 = scmp.eq.s32.totalorder %s24, 0
    %p302 = por %p300, %p301
    %p303 = scmp.ne.s32.totalorder %s291, %s292
    %p304 = scmp.eq.s32.totalorder %s25, 1
    %p305 = por %p303, %p304
    %p307 = scmp.ne.s32.totalorder %s292, %s306
    %p308 = scmp.eq.s32.totalorder %s25, 0
    %p309 = por %p307, %p308
    %s310 = ssub.s32 %s19, %s26
    %p311 = scmp.eq.s32.totalorder %s310, 0
    %s313 = sadd.s32 %s312, 1
    %s314 = scalar_select %p311, %s312, %s313
    %p317 = pneg %p311
    %p318 = scmp.eq.s32.totalorder %s19, 1
    %p319 = por %p317, %p318
    %p320 = scmp.ne.s32.totalorder %s312, %s315
    %p321 = scmp.eq.s32.totalorder %s19, 0
    %p322 = por %p320, %p321
    %p323 = scmp.ne.s32.totalorder %s312, %s315
    %p324 = scmp.eq.s32.totalorder %s24, 1
    %p325 = por %p323, %p324
    %p326 = scmp.ne.s32.totalorder %s315, %s316
    %p327 = scmp.eq.s32.totalorder %s24, 0
    %p328 = por %p326, %p327
    %p329 = scmp.ne.s32.totalorder %s315, %s316
    %p330 = scmp.eq.s32.totalorder %s25, 1
    %p331 = por %p329, %p330
    %p333 = scmp.ne.s32.totalorder %s316, %s332
    %p334 = scmp.eq.s32.totalorder %s25, 0
    %p335 = por %p333, %p334
    %p336 = scmp.le.s32.totalorder 1, %s19
    %p337 = scmp.lt.s32.totalorder %s19, 3
    %p338 = pnand %p336, %p337
    %p339 = pneg %p338
    // Predicated region
    $region9: #{resnet_block_forward.1} parent=5 // pred_check
      _
    $region10: #{resnet_block_forward.1} parent=5 // pred_check_branch
      %341 = sbr.rel (%p338) target = $region12
    $region11: #{resnet_block_forward.1} parent=5 // pred_region
      %s342 = ssub.s32 %s19, 1
      // Predicated region
      $region13: #{resnet_block_forward.1} parent=11 // pred_check
        %p343 = pneg %p92
      $region14: #{resnet_block_forward.1} parent=11 // pred_check_branch
        %345 = sbr.rel (%p343) target = $region16
      $region15: #{resnet_block_forward.1} parent=11 // pred_region
        _
      $region16: #{resnet_block_forward.1} parent=11 // pred_fallthru
        _
      // Predicated region
      $region17: #{resnet_block_forward.1} parent=11 // pred_check
        %p346 = pneg %p113
      $region18: #{resnet_block_forward.1} parent=11 // pred_check_branch
        %348 = sbr.rel (%p346) target = $region20
      $region19: #{resnet_block_forward.1} parent=11 // pred_region
        _
      $region20: #{resnet_block_forward.1} parent=11 // pred_fallthru
        _
      // Predicated region
      $region21: #{resnet_block_forward.1} parent=11 // pred_check
        %p349 = pneg %p134
      $region22: #{resnet_block_forward.1} parent=11 // pred_check_branch
        %351 = sbr.rel (%p349) target = $region24
      $region23: #{resnet_block_forward.1} parent=11 // pred_region
        _
      $region24: #{resnet_block_forward.1} parent=11 // pred_fallthru
        _
      // Predicated region
      $region25: #{resnet_block_forward.1} parent=11 // pred_check
        %p352 = pneg %p155
      $region26: #{resnet_block_forward.1} parent=11 // pred_check_branch
        %354 = sbr.rel (%p352) target = $region28
      $region27: #{resnet_block_forward.1} parent=11 // pred_region
        _
      $region28: #{resnet_block_forward.1} parent=11 // pred_fallthru
        _
      // Predicated region
      $region29: #{resnet_block_forward.1} parent=11 // pred_check
        %p355 = pneg %p176
      $region30: #{resnet_block_forward.1} parent=11 // pred_check_branch
        %357 = sbr.rel (%p355) target = $region32
      $region31: #{resnet_block_forward.1} parent=11 // pred_region
        _
      $region32: #{resnet_block_forward.1} parent=11 // pred_fallthru
        _
      // Predicated region
      $region33: #{resnet_block_forward.1} parent=11 // pred_check
        %p358 = pneg %p197
      $region34: #{resnet_block_forward.1} parent=11 // pred_check_branch
        %360 = sbr.rel (%p358) target = $region36
      $region35: #{resnet_block_forward.1} parent=11 // pred_region
        _
      $region36: #{resnet_block_forward.1} parent=11 // pred_fallthru
        _
      // Predicated region
      $region37: #{resnet_block_forward.1} parent=11 // pred_check
        %p361 = pneg %p218
      $region38: #{resnet_block_forward.1} parent=11 // pred_check_branch
        %363 = sbr.rel (%p361) target = $region40
      $region39: #{resnet_block_forward.1} parent=11 // pred_region
        _
      $region40: #{resnet_block_forward.1} parent=11 // pred_fallthru
        _
      // Predicated region
      $region41: #{resnet_block_forward.1} parent=11 // pred_check
        %p364 = pneg %p239
      $region42: #{resnet_block_forward.1} parent=11 // pred_check_branch
        %366 = sbr.rel (%p364) target = $region44
      $region43: #{resnet_block_forward.1} parent=11 // pred_region
        _
      $region44: #{resnet_block_forward.1} parent=11 // pred_fallthru
        _
      // Predicated region
      $region45: #{resnet_block_forward.1} parent=11 // pred_check
        %p367 = pneg %p260
      $region46: #{resnet_block_forward.1} parent=11 // pred_check_branch
        %369 = sbr.rel (%p367) target = $region48
      $region47: #{resnet_block_forward.1} parent=11 // pred_region
        _
      $region48: #{resnet_block_forward.1} parent=11 // pred_fallthru
        _
      // Predicated region
      $region49: #{resnet_block_forward.1} parent=11 // pred_check
        %p370 = pneg %p281
      $region50: #{resnet_block_forward.1} parent=11 // pred_check_branch
        %372 = sbr.rel (%p370) target = $region52
      $region51: #{resnet_block_forward.1} parent=11 // pred_region
        _
      $region52: #{resnet_block_forward.1} parent=11 // pred_fallthru
        _
      // Predicated region
      $region53: #{resnet_block_forward.1} parent=11 // pred_check
        %p373 = pneg %p302
      $region54: #{resnet_block_forward.1} parent=11 // pred_check_branch
        %375 = sbr.rel (%p373) target = $region56
      $region55: #{resnet_block_forward.1} parent=11 // pred_region
        _
      $region56: #{resnet_block_forward.1} parent=11 // pred_fallthru
        _
    $region12: #{resnet_block_forward.1} parent=5 // pred_fallthru
      _
    %p376 = scmp.lt.s32.totalorder %s19, 2
    // Predicated region
    $region57: #{resnet_block_forward.1} parent=5 // pred_check
      %p377 = pneg %p376
    $region58: #{resnet_block_forward.1} parent=5 // pred_check_branch
      %379 = sbr.rel (%p377) target = $region60
    $region59: #{resnet_block_forward.1} parent=5 // pred_region
      // Predicated region
      $region61: #{resnet_block_forward.1} parent=59 // pred_check
        %p380 = pneg %p39
      $region62: #{resnet_block_forward.1} parent=59 // pred_check_branch
        %382 = sbr.rel (%p380) target = $region64
      $region63: #{resnet_block_forward.1} parent=59 // pred_region
        %p383 = scmp.lt.s32.totalorder %s19, 1
        %s384 = scalar_select %p383, %s19, 1
        %s385 = smul.addr %s384, 2
        %s386 = smul.addr %s385, 4
        %s387 = scalar_lea.vmem %s0, %s386
      $region64: #{resnet_block_forward.1} parent=59 // pred_fallthru
        _
      // Predicated region
      $region65: #{resnet_block_forward.1} parent=59 // pred_check
        %p388 = pneg %p65
      $region66: #{resnet_block_forward.1} parent=59 // pred_check_branch
        %390 = sbr.rel (%p388) target = $region68
      $region67: #{resnet_block_forward.1} parent=59 // pred_region
        %p391 = scmp.lt.s32.totalorder %s19, 1
        %s392 = scalar_select %p391, %s19, 1
        %s393 = scalar_lea.vmem %s1, %s392
      $region68: #{resnet_block_forward.1} parent=59 // pred_fallthru
        _
    $region60: #{resnet_block_forward.1} parent=5 // pred_fallthru
      _
    %p394 = scmp.le.s32.totalorder 1, %s19
    %p395 = scmp.lt.s32.totalorder %s19, 3
    %p396 = pnand %p394, %p395
    %p397 = pneg %p396
    // Predicated region
    $region69: #{resnet_block_forward.1} parent=5 // pred_check
      _
    $region70: #{resnet_block_forward.1} parent=5 // pred_check_branch
      %399 = sbr.rel (%p396) target = $region72
    $region71: #{resnet_block_forward.1} parent=5 // pred_region
      %s400 = ssub.s32 %s19, 1
      %p401 = scmp.lt.s32.totalorder %s24, 1
      %s402 = scalar_select %p401, %s24, 1
      %s403 = smul.addr %s402, 2
      %s404 = smul.addr %s403, 4
      %s405 = scalar_lea.vmem %s0, %s404
      %p406 = pneg %p45
      %p407 = pneg %p42
      %p408 = scmp.lt.s32.totalorder %s24, 1
      %s409 = scalar_select %p408, %s24, 1
      %s410 = scalar_lea.vmem %s1, %s409
      %p411 = pneg %p71
      %p412 = pneg %p68
      %p413 = pneg %p92
      %p414 = pneg %p89
      %p415 = pneg %p113
      %p416 = pneg %p110
      %p417 = pneg %p134
      %p418 = pneg %p131
      %p419 = pneg %p155
      %p420 = pneg %p152
      %p421 = pneg %p176
      %p422 = pneg %p173
      %p423 = pneg %p197
      %p424 = pneg %p194
      %p425 = pneg %p218
      %p426 = pneg %p215
      %p427 = pneg %p239
      %p428 = pneg %p236
      %p429 = pneg %p260
      %p430 = pneg %p257
      %p431 = pneg %p281
      %p432 = pneg %p278
      %p433 = pneg %p302
      %p434 = pneg %p299
      %p435 = pneg %p328
      %p436 = pneg %p325
      %p437 = scmp.lt.s32.totalorder %s24, 1
      %s438 = scalar_select %p437, %s24, 1
      %s439 = smul.addr %s438, 2
      %s440 = smul.addr %s439, 8
      %s441 = scalar_lea.vmem %s13, %s440
      %p442 = scmp.lt.s32.totalorder %s24, 1
      %s443 = scalar_select %p442, %s24, 1
      %s444 = smul.addr %s443, 2
      %s445 = smul.addr %s444, 4
      %s446 = scalar_lea.vmem %s0, %s445
      %p447 = scmp.lt.s32.totalorder %s24, 1
      %s448 = scalar_select %p447, %s24, 1
      %s449 = scalar_lea.vmem %s1, %s448
      %p450 = scmp.lt.s32.totalorder %s24, 1
      %s451 = scalar_select %p450, %s24, 1
      %s452 = smul.addr %s451, 2
      %s453 = smul.addr %s452, 8
      %s454 = scalar_lea.vmem %s13, %s453
      %v455 = vld [vmem:[%s446] sm:$0xff]
      %v456 = vld [vmem:[%s449] sm:$0x1]
      %v457 = vxor.u32 %v456, 2147483648
      %v458 = vmul.f32 %v457, 1.442695
      %v459 = vpow.pop %v458
      %v460 = vadd.f32 %v459, 1.0
      %v461 = vrcp.pop %v460
      %v462 = vmul.f32 %v460, %v461
      %v463 = vsub.f32 1.0, %v462
      %v464 = vmul.f32 %v461, %v463
      %v465 = vadd.f32 %v461, %v464
      %vm466 = vweird.f32 %v460
      %vm467 = vweird.f32 %v461
      %vm468 = vmor %vm466, %vm467
      %v469 = vsel %vm468, %v461, %v465
      %v470 = vand.u32 2147483647, %v460
      %vm471 = vcmp.eq.f32.partialorder %v470, 8.507059e+37
      %v472 = vand.u32 %v460, 2147483648
      %v473 = vor.u32 1.1754944e-38, %v472
      %v474 = vsel %vm471, %v473, %v469
      %v475 = vmul.f32 1.0, %v474
      %v476 = vmul.f32 %v456, %v475
      %v477 = vld [vmem:[%s3] sm:$0xff]
      %v478 = vld [vmem:[%s3 + $0x8] sm:$0xff]
      %v480 = vperm.slane %v476, 0
      %v482 = vmul.f32 %v477, %v480
      %v483 = vmul.f32 %v478, %v480
      %vm484 = vcmask 261120
      %v485 = vsel %vm484, %v482, 0.0
      %486 = vadd.xlane.f32.xlu0 %v485
      %v487 = vpop.xlane.xlu0 %486
      %v488 = vsel %vm484, %v483, 0.0
      %489 = vadd.xlane.f32.xlu0 %v488
      %v490 = vpop.xlane.xlu0 %489
      %v491 = vld [vmem:[%s4] sm:$0xff]
      %v492 = vld [vmem:[%s4 + $0x8] sm:$0xff]
      %v493 = vadd.f32 %v487, %v491
      %v494 = vadd.f32 %v490, %v492
      %496 = vst [vmem:[#allocation1] ss:$2 sm:$0xff] %v455
      %v497 = vld.sshfl [vmem:[#allocation1] sm:$0xff pattern:$0x75316420]
      %v498 = vld.sshfl [vmem:[#allocation1 + $0x8] sm:$0xff pattern:$0x75316420]
      %501 = vrot.lane.b32.xlu0 %v497, 17
      %v502 = vpop.permute.xlu0 %501
      %503 = vrot.lane.b32.xlu0 %v498, 17
      %v504 = vpop.permute.xlu0 %503
      %v505 = vlaneseq
      %v506 = vand.u32 %v505, 127
      %vm507 = vcmp.lt.s32.totalorder %v506, 17
      %v508 = vsel %vm507, %v502, %v504
      %v509 = vsel %vm507, %v504, %v502
      %v510 = vld [vmem:[%s2] ss:$8 sm:$0x3]
      %v512 = vperm.slane %v510, 0
      %v513 = vperm.slane %v510, 1
      %v516 = vmul.f32 %v509, %v512
      %v517 = vmul.f32 %v508, %v513
      %518 = vst [vmem:[#allocation2] sm:$0xf] %v516
      %519 = vst [vmem:[#allocation2 + $0x8] sm:$0xf] %v517
      %520 = vst [vmem:[#allocation1] ss:$2 sm:$0xff] %v455
      %v521 = vld.sshfl [vmem:[#allocation1] sm:$0xff pattern:$0x75316420]
      %v522 = vld.sshfl [vmem:[#allocation1 + $0x8] sm:$0xff pattern:$0x75316420]
      %525 = vrot.lane.b32.xlu0 %v521, 16
      %v526 = vpop.permute.xlu0 %525
      %527 = vrot.lane.b32.xlu0 %v522, 16
      %v528 = vpop.permute.xlu0 %527
      %vm529 = vcmp.lt.s32.totalorder %v506, 16
      %v530 = vsel %vm529, %v526, %v528
      %v531 = vsel %vm529, %v528, %v526
      %s532 = scalar_lea.vmem %s2, 1
      %v533 = vld [vmem:[%s532] ss:$8 sm:$0x3]
      %v535 = vperm.slane %v533, 0
      %v536 = vperm.slane %v533, 1
      %v539 = vmul.f32 %v531, %v535
      %v540 = vmul.f32 %v530, %v536
      %v543 = vrot.slane %v539, 4
      %v544 = vrot.slane %v540, 4
      %547 = vst [vmem:[#allocation2] sm:$0xf0] %v543
      %548 = vst [vmem:[#allocation2 + $0x8] sm:$0xf0] %v544
      %549 = vst [vmem:[#allocation1] ss:$2 sm:$0xff] %v455
      %v550 = vld.sshfl [vmem:[#allocation1] sm:$0xff pattern:$0x75316420]
      %v551 = vld.sshfl [vmem:[#allocation1 + $0x8] sm:$0xff pattern:$0x75316420]
      %554 = vrot.lane.b32.xlu0 %v550, 15
      %v555 = vpop.permute.xlu0 %554
      %556 = vrot.lane.b32.xlu0 %v551, 15
      %v557 = vpop.permute.xlu0 %556
      %vm558 = vcmp.lt.s32.totalorder %v506, 15
      %v559 = vsel %vm558, %v555, %v557
      %v560 = vsel %vm558, %v557, %v555
      %s561 = scalar_lea.vmem %s2, 2
      %v562 = vld [vmem:[%s561] ss:$8 sm:$0x3]
      %v564 = vperm.slane %v562, 0
      %v565 = vperm.slane %v562, 1
      %v568 = vmul.f32 %v560, %v564
      %v569 = vmul.f32 %v559, %v565
      %570 = vst [vmem:[#allocation2 + $0x10] sm:$0xf] %v568
      %571 = vst [vmem:[#allocation2 + $0x18] sm:$0xf] %v569
      %572 = vst [vmem:[#allocation1] ss:$2 sm:$0xff] %v455
      %v573 = vld.sshfl [vmem:[#allocation1] sm:$0xff pattern:$0x75316420]
      %v574 = vld.sshfl [vmem:[#allocation1 + $0x8] sm:$0xff pattern:$0x75316420]
      %577 = vrot.lane.b32.xlu0 %v573, 1
      %v578 = vpop.permute.xlu0 %577
      %579 = vrot.lane.b32.xlu0 %v574, 1
      %v580 = vpop.permute.xlu0 %579
      %vm581 = vcmp.lt.s32.totalorder %v506, 1
      %v582 = vsel %vm581, %v578, %v580
      %v583 = vsel %vm581, %v580, %v578
      %s584 = scalar_lea.vmem %s2, 3
      %v585 = vld [vmem:[%s584] ss:$8 sm:$0x3]
      %v587 = vperm.slane %v585, 0
      %v588 = vperm.slane %v585, 1
      %v591 = vmul.f32 %v583, %v587
      %v592 = vmul.f32 %v582, %v588
      %v595 = vrot.slane %v591, 4
      %v596 = vrot.slane %v592, 4
      %599 = vst [vmem:[#allocation2 + $0x10] sm:$0xf0] %v595
      %600 = vst [vmem:[#allocation2 + $0x18] sm:$0xf0] %v596
      %s601 = scalar_lea.vmem %s2, 4
      %v602 = vld [vmem:[%s601] ss:$8 sm:$0x3]
      %v604 = vperm.slane %v602, 0
      %v605 = vperm.slane %v602, 1
      %v606 = vrot.slane %v605, 4
      %vm607 = vcmask 1043456
      %v608 = vsel %vm607, %v604, %v606
      %v610 = vmul.f32 %v455, %v608
      %612 = vst [vmem:[#allocation1] ss:$2 sm:$0xff] %v610
      %v613 = vld.sshfl [vmem:[#allocation1] sm:$0xff pattern:$0x75316420]
      %v614 = vld.sshfl [vmem:[#allocation1 + $0x8] sm:$0xff pattern:$0x75316420]
      %617 = vst [vmem:[#allocation2 + $0x20] sm:$0xf] %v613
      %618 = vst [vmem:[#allocation2 + $0x28] sm:$0xf] %v614
      %619 = vst [vmem:[#allocation1] ss:$2 sm:$0xff] %v455
      %v620 = vld.sshfl [vmem:[#allocation1] sm:$0xff pattern:$0x75316420]
      %v621 = vld.sshfl [vmem:[#allocation1 + $0x8] sm:$0xff pattern:$0x75316420]
      %624 = vrot.lane.b32.xlu0 %v620, 127
      %v625 = vpop.permute.xlu0 %624
      %626 = vrot.lane.b32.xlu0 %v621, 127
      %v627 = vpop.permute.xlu0 %626
      %vm628 = vcmp.lt.s32.totalorder %v506, 127
      %v629 = vsel %vm628, %v625, %v627
      %v630 = vsel %vm628, %v627, %v625
      %s631 = scalar_lea.vmem %s2, 5
      %v632 = vld [vmem:[%s631] ss:$8 sm:$0x3]
      %v634 = vperm.slane %v632, 0
      %v635 = vperm.slane %v632, 1
      %v638 = vmul.f32 %v629, %v634
      %v639 = vmul.f32 %v630, %v635
      %v642 = vrot.slane %v638, 4
      %v643 = vrot.slane %v639, 4
      %646 = vst [vmem:[#allocation2 + $0x20] sm:$0xf0] %v642
      %647 = vst [vmem:[#allocation2 + $0x28] sm:$0xf0] %v643
      %648 = vst [vmem:[#allocation1] ss:$2 sm:$0xff] %v455
      %v649 = vld.sshfl [vmem:[#allocation1] sm:$0xff pattern:$0x75316420]
      %v650 = vld.sshfl [vmem:[#allocation1 + $0x8] sm:$0xff pattern:$0x75316420]
      %653 = vrot.lane.b32.xlu0 %v649, 113
      %v654 = vpop.permute.xlu0 %653
      %655 = vrot.lane.b32.xlu0 %v650, 113
      %v656 = vpop.permute.xlu0 %655
      %vm657 = vcmp.lt.s32.totalorder %v506, 113
      %v658 = vsel %vm657, %v654, %v656
      %v659 = vsel %vm657, %v656, %v654
      %s660 = scalar_lea.vmem %s2, 6
      %v661 = vld [vmem:[%s660] ss:$8 sm:$0x3]
      %v663 = vperm.slane %v661, 0
      %v664 = vperm.slane %v661, 1
      %v667 = vmul.f32 %v658, %v663
      %v668 = vmul.f32 %v659, %v664
      %669 = vst [vmem:[#allocation2 + $0x30] sm:$0xf] %v667
      %670 = vst [vmem:[#allocation2 + $0x38] sm:$0xf] %v668
      %671 = vst [vmem:[#allocation1] ss:$2 sm:$0xff] %v455
      %v672 = vld.sshfl [vmem:[#allocation1] sm:$0xff pattern:$0x75316420]
      %v673 = vld.sshfl [vmem:[#allocation1 + $0x8] sm:$0xff pattern:$0x75316420]
      %676 = vrot.lane.b32.xlu0 %v672, 112
      %v677 = vpop.permute.xlu0 %676
      %678 = vrot.lane.b32.xlu0 %v673, 112
      %v679 = vpop.permute.xlu0 %678
      %vm680 = vcmp.lt.s32.totalorder %v506, 112
      %v681 = vsel %vm680, %v677, %v679
      %v682 = vsel %vm680, %v679, %v677
      %s683 = scalar_lea.vmem %s2, 7
      %v684 = vld [vmem:[%s683] ss:$8 sm:$0x3]
      %v686 = vperm.slane %v684, 0
      %v687 = vperm.slane %v684, 1
      %v690 = vmul.f32 %v681, %v686
      %v691 = vmul.f32 %v682, %v687
      %v694 = vrot.slane %v690, 4
      %v695 = vrot.slane %v691, 4
      %698 = vst [vmem:[#allocation2 + $0x30] sm:$0xf0] %v694
      %699 = vst [vmem:[#allocation2 + $0x38] sm:$0xf0] %v695
      %700 = vst [vmem:[#allocation1] ss:$2 sm:$0xff] %v455
      %v701 = vld.sshfl [vmem:[#allocation1] sm:$0xff pattern:$0x75316420]
      %v702 = vld.sshfl [vmem:[#allocation1 + $0x8] sm:$0xff pattern:$0x75316420]
      %705 = vrot.lane.b32.xlu0 %v701, 111
      %v706 = vpop.permute.xlu0 %705
      %707 = vrot.lane.b32.xlu0 %v702, 111
      %v708 = vpop.permute.xlu0 %707
      %vm709 = vcmp.lt.s32.totalorder %v506, 111
      %v710 = vsel %vm709, %v706, %v708
      %v711 = vsel %vm709, %v708, %v706
      %s712 = scalar_lea.vmem %s2, 16
      %v713 = vld [vmem:[%s712] ss:$8 sm:$0x3]
      %v715 = vperm.slane %v713, 0
      %v716 = vperm.slane %v713, 1
      %v719 = vmul.f32 %v710, %v715
      %v720 = vmul.f32 %v711, %v716
      %721 = vst [vmem:[#allocation2 + $0x40] sm:$0xf] %v719
      %722 = vst [vmem:[#allocation2 + $0x48] sm:$0xf] %v720
      %v723 = vld [vmem:[#allocation2] sm:$0xff]
      %v724 = vld [vmem:[#allocation2 + $0x8] sm:$0xff]
      %v725 = vld [vmem:[#allocation2 + $0x10] sm:$0xff]
      %v726 = vld [vmem:[#allocation2 + $0x18] sm:$0xff]
      %v727 = vld [vmem:[#allocation2 + $0x20] sm:$0xff]
      %v728 = vld [vmem:[#allocation2 + $0x28] sm:$0xff]
      %v729 = vld [vmem:[#allocation2 + $0x30] sm:$0xff]
      %v730 = vld [vmem:[#allocation2 + $0x38] sm:$0xff]
      %v731 = vld [vmem:[#allocation2 + $0x40] sm:$0xf]
      %v732 = vld [vmem:[#allocation2 + $0x48] sm:$0xf]
      %v733 = vld [vmem:[%s5] sm:$0xff]
      %v734 = vld [vmem:[%s5 + $0x8] sm:$0xff]
      %v735 = vld [vmem:[%s6] sm:$0xff]
      %v736 = vld [vmem:[%s6 + $0x8] sm:$0xff]
      %738 = vset.pattern.permute.xlu0 0
      %739 = vperm.xlu0 %738, %v735
      %v740 = vpop.permute.xlu0 %739
      %743 = vset.pattern.permute.xlu0 0
      %744 = vperm.xlu0 %743, %v736
      %v745 = vpop.permute.xlu0 %744
      %vm747 = vcmask 293888
      %v749 = vsel %vm747, %v733, 0
      %v752 = vsel %vm747, %v734, 0
      %v755 = vsel %vm607, %v731, 0
      %v758 = vsel %vm607, %v732, 0
      %760 = vmatpush.msra.mxu0 0.0
      %761 = vmatpush.msra.mxu0 0.0
      %762 = vmatpush.msra.mxu0 0.0
      %763 = vmatpush.msra.mxu0 0.0
      %764 = vmatpush.msra.mxu0 0.0
      %765 = vmatpush.msra.mxu0 0.0
      %766 = vmatpush.msra.mxu0 0.0
      %767 = vmatpush.msra.mxu0 0.0
      %768 = vmatpush.msra.mxu0 0.0
      %769 = vmatpush.msra.mxu0 0.0
      %770 = vmatpush.msra.mxu0 0.0
      %771 = vmatpush.msra.mxu0 %v755
      %772 = vmatpush.msra.mxu0 %v729
      %773 = vmatpush.msra.mxu0 %v727
      %774 = vmatpush.msra.mxu0 %v725
      %775 = vmatpush.msra.mxu0 %v723
      %776 = vmatmul.f32.gmra.mxu0 %v749
      %v777 = vpop.f32.mrf.mxu0
      %v778 = vadd.f32 %v740, %v777
      %779 = vmatmul.f32.gmra.mxu0 %v752
      %v780 = vpop.f32.mrf.mxu0
      %v781 = vadd.f32 %v745, %v780
      %782 = vdwg.mxu0
      %783 = vmatpush.msra.mxu0 0.0
      %784 = vmatpush.msra.mxu0 0.0
      %785 = vmatpush.msra.mxu0 0.0
      %786 = vmatpush.msra.mxu0 0.0
      %787 = vmatpush.msra.mxu0 0.0
      %788 = vmatpush.msra.mxu0 0.0
      %789 = vmatpush.msra.mxu0 0.0
      %790 = vmatpush.msra.mxu0 0.0
      %791 = vmatpush.msra.mxu0 0.0
      %792 = vmatpush.msra.mxu0 0.0
      %793 = vmatpush.msra.mxu0 0.0
      %794 = vmatpush.msra.mxu0 %v758
      %795 = vmatpush.msra.mxu0 %v730
      %796 = vmatpush.msra.mxu0 %v728
      %797 = vmatpush.msra.mxu0 %v726
      %798 = vmatpush.msra.mxu0 %v724
      %799 = vmatmul.f32.gmra.mxu0 %v749
      %v800 = vpop.f32.mrf.mxu0
      %v801 = vadd.f32 %v740, %v800
      %802 = vmatmul.f32.gmra.mxu0 %v752
      %v803 = vpop.f32.mrf.mxu0
      %v804 = vadd.f32 %v745, %v803
      %805 = vdwg.mxu0
      %v806 = vld [vmem:[%s7] sm:$0xff]
      %v807 = vld [vmem:[%s8] sm:$0xff]
      %v808 = vadd.f32 %v778, %v801
      %809 = vadd.xlane.f32.xlu0 %v808
      %v810 = vpop.xlane.xlu0 %809
      %v811 = vrcp.pop 256.0
      %v812 = vmul.f32 256.0, %v811
      %v813 = vsub.f32 1.0, %v812
      %v814 = vmul.f32 %v811, %v813
      %v815 = vadd.f32 %v811, %v814
      %vm816 = vweird.f32 %v811
      %v817 = vsel %vm816, %v811, %v815
      %v818 = vmul.f32 %v810, %v817
      %v819 = vsub.f32 %v778, %v818
      %v820 = vsub.f32 %v801, %v818
      %v821 = vmul.f32 %v819, %v819
      %v822 = vmul.f32 %v820, %v820
      %v823 = vadd.f32 %v821, %v822
      %824 = vadd.xlane.f32.xlu0 %v823
      %v825 = vpop.xlane.xlu0 %824
      %v826 = vmul.f32 %v825, %v817
      %v827 = vadd.f32 %v826, 1e-05
      %v828 = vrsqrt.pop %v827
      %v829 = vmul.f32 %v828, %v827
      %v830 = vmul.f32 %v829, %v828
      %v831 = vmul.f32 0.5, %v830
      %v832 = vsub.f32 1.5, %v831
      %v833 = vmul.f32 %v828, %v832
      %vm834 = vweird.f32 %v827
      %vm835 = vweird.f32 %v828
      %vm836 = vmor %vm834, %vm835
      %v837 = vsel %vm836, %v828, %v833
      %v838 = vmul.f32 %v819, %v837
      %v839 = vmul.f32 %v820, %v837
      %841 = vset.pattern.permute.xlu0 0
      %842 = vperm.xlu0 %841, %v806
      %v843 = vpop.permute.xlu0 %842
      %v845 = vmul.f32 %v838, %v843
      %v846 = vmul.f32 %v839, %v843
      %848 = vset.pattern.permute.xlu0 0
      %849 = vperm.xlu0 %848, %v807
      %v850 = vpop.permute.xlu0 %849
      %v852 = vadd.f32 %v845, %v850
      %v853 = vadd.f32 %v846, %v850
      %v854 = vadd.f32 %v493, 1.0
      %856 = vset.pattern.permute.xlu0 0
      %857 = vperm.xlu0 %856, %v854
      %v858 = vpop.permute.xlu0 %857
      %v860 = vmul.f32 %v852, %v858
      %v861 = vmul.f32 %v853, %v858
      %863 = vset.pattern.permute.xlu0 0
      %864 = vperm.xlu0 %863, %v494
      %v865 = vpop.permute.xlu0 %864
      %v867 = vadd.f32 %v860, %v865
      %v868 = vadd.f32 %v861, %v865
      %v869 = vxor.u32 %v867, 2147483648
      %v870 = vxor.u32 %v868, 2147483648
      %v871 = vmul.f32 %v869, 1.442695
      %v872 = vpow.pop %v871
      %v873 = vmul.f32 %v870, 1.442695
      %v874 = vpow.pop %v873
      %v875 = vadd.f32 %v872, 1.0
      %v876 = vadd.f32 %v874, 1.0
      %v877 = vrcp.pop %v875
      %v878 = vmul.f32 %v875, %v877
      %v879 = vsub.f32 1.0, %v878
      %v880 = vmul.f32 %v877, %v879
      %v881 = vadd.f32 %v877, %v880
      %vm882 = vweird.f32 %v875
      %vm883 = vweird.f32 %v877
      %vm884 = vmor %vm882, %vm883
      %v885 = vsel %vm884, %v877, %v881
      %v886 = vand.u32 2147483647, %v875
      %vm887 = vcmp.eq.f32.partialorder %v886, 8.507059e+37
      %v888 = vand.u32 %v875, 2147483648
      %v889 = vor.u32 1.1754944e-38, %v888
      %v890 = vsel %vm887, %v889, %v885
      %v891 = vmul.f32 1.0, %v890
      %v892 = vrcp.pop %v876
      %v893 = vmul.f32 %v876, %v892
      %v894 = vsub.f32 1.0, %v893
      %v895 = vmul.f32 %v892, %v894
      %v896 = vadd.f32 %v892, %v895
      %vm897 = vweird.f32 %v876
      %vm898 = vweird.f32 %v892
      %vm899 = vmor %vm897, %vm898
      %v900 = vsel %vm899, %v892, %v896
      %v901 = vand.u32 2147483647, %v876
      %vm902 = vcmp.eq.f32.partialorder %v901, 8.507059e+37
      %v903 = vand.u32 %v876, 2147483648
      %v904 = vor.u32 1.1754944e-38, %v903
      %v905 = vsel %vm902, %v904, %v900
      %v906 = vmul.f32 1.0, %v905
      %v907 = vmul.f32 %v867, %v891
      %v908 = vmul.f32 %v868, %v906
      %909 = vrot.lane.b32.xlu0 %v907, 17
      %v910 = vpop.permute.xlu0 %909
      %911 = vrot.lane.b32.xlu0 %v908, 17
      %v912 = vpop.permute.xlu0 %911
      %v913 = vsel %vm507, %v910, %v912
      %v914 = vsel %vm507, %v912, %v910
      %v915 = vld [vmem:[%s2] ss:$8 sm:$0x3]
      %v917 = vperm.slane %v915, 0
      %v918 = vperm.slane %v915, 1
      %v921 = vmul.f32 %v914, %v917
      %v922 = vmul.f32 %v913, %v918
      %923 = vst [vmem:[#allocation2] sm:$0xff] %v921
      %924 = vst [vmem:[#allocation2 + $0x8] sm:$0xff] %v922
      %925 = vrot.lane.b32.xlu0 %v907, 16
      %v926 = vpop.permute.xlu0 %925
      %927 = vrot.lane.b32.xlu0 %v908, 16
      %v928 = vpop.permute.xlu0 %927
      %v929 = vsel %vm529, %v926, %v928
      %v930 = vsel %vm529, %v928, %v926
      %v931 = vld [vmem:[%s532] ss:$8 sm:$0x3]
      %v933 = vperm.slane %v931, 0
      %v934 = vperm.slane %v931, 1
      %v937 = vmul.f32 %v930, %v933
      %v938 = vmul.f32 %v929, %v934
      %939 = vst [vmem:[#allocation2 + $0x10] sm:$0xff] %v937
      %940 = vst [vmem:[#allocation2 + $0x18] sm:$0xff] %v938
      %941 = vrot.lane.b32.xlu0 %v907, 15
      %v942 = vpop.permute.xlu0 %941
      %943 = vrot.lane.b32.xlu0 %v908, 15
      %v944 = vpop.permute.xlu0 %943
      %v945 = vsel %vm558, %v942, %v944
      %v946 = vsel %vm558, %v944, %v942
      %v947 = vld [vmem:[%s561] ss:$8 sm:$0x3]
      %v949 = vperm.slane %v947, 0
      %v950 = vperm.slane %v947, 1
      %v953 = vmul.f32 %v946, %v949
      %v954 = vmul.f32 %v945, %v950
      %955 = vst [vmem:[#allocation2 + $0x20] sm:$0xff] %v953
      %956 = vst [vmem:[#allocation2 + $0x28] sm:$0xff] %v954
      %957 = vrot.lane.b32.xlu0 %v907, 1
      %v958 = vpop.permute.xlu0 %957
      %959 = vrot.lane.b32.xlu0 %v908, 1
      %v960 = vpop.permute.xlu0 %959
      %v961 = vsel %vm581, %v958, %v960
      %v962 = vsel %vm581, %v960, %v958
      %v963 = vld [vmem:[%s584] ss:$8 sm:$0x3]
      %v965 = vperm.slane %v963, 0
      %v966 = vperm.slane %v963, 1
      %v969 = vmul.f32 %v962, %v965
      %v970 = vmul.f32 %v961, %v966
      %971 = vst [vmem:[#allocation2 + $0x30] sm:$0xff] %v969
      %972 = vst [vmem:[#allocation2 + $0x38] sm:$0xff] %v970
      %v973 = vld [vmem:[%s601] ss:$8 sm:$0x3]
      %v975 = vperm.slane %v973, 0
      %v976 = vperm.slane %v973, 1
      %v979 = vmul.f32 %v907, %v975
      %v980 = vmul.f32 %v908, %v976
      %981 = vst [vmem:[#allocation2 + $0x40] sm:$0xff] %v979
      %982 = vst [vmem:[#allocation2 + $0x48] sm:$0xff] %v980
      %983 = vrot.lane.b32.xlu0 %v907, 127
      %v984 = vpop.permute.xlu0 %983
      %985 = vrot.lane.b32.xlu0 %v908, 127
      %v986 = vpop.permute.xlu0 %985
      %v987 = vsel %vm628, %v984, %v986
      %v988 = vsel %vm628, %v986, %v984
      %v989 = vld [vmem:[%s631] ss:$8 sm:$0x3]
      %v991 = vperm.slane %v989, 0
      %v992 = vperm.slane %v989, 1
      %v995 = vmul.f32 %v987, %v991
      %v996 = vmul.f32 %v988, %v992
      %997 = vst [vmem:[#allocation2 + $0x50] sm:$0xff] %v995
      %998 = vst [vmem:[#allocation2 + $0x58] sm:$0xff] %v996
      %999 = vrot.lane.b32.xlu0 %v907, 113
      %v1000 = vpop.permute.xlu0 %999
      %1001 = vrot.lane.b32.xlu0 %v908, 113
      %v1002 = vpop.permute.xlu0 %1001
      %v1003 = vsel %vm657, %v1000, %v1002
      %v1004 = vsel %vm657, %v1002, %v1000
      %v1005 = vld [vmem:[%s660] ss:$8 sm:$0x3]
      %v1007 = vperm.slane %v1005, 0
      %v1008 = vperm.slane %v1005, 1
      %v1011 = vmul.f32 %v1003, %v1007
      %v1012 = vmul.f32 %v1004, %v1008
      %1013 = vst [vmem:[#allocation2 + $0x60] sm:$0xff] %v1011
      %1014 = vst [vmem:[#allocation2 + $0x68] sm:$0xff] %v1012
      %1015 = vrot.lane.b32.xlu0 %v907, 112
      %v1016 = vpop.permute.xlu0 %1015
      %1017 = vrot.lane.b32.xlu0 %v908, 112
      %v1018 = vpop.permute.xlu0 %1017
      %v1019 = vsel %vm680, %v1016, %v1018
      %v1020 = vsel %vm680, %v1018, %v1016
      %v1021 = vld [vmem:[%s683] ss:$8 sm:$0x3]
      %v1023 = vperm.slane %v1021, 0
      %v1024 = vperm.slane %v1021, 1
      %v1027 = vmul.f32 %v1019, %v1023
      %v1028 = vmul.f32 %v1020, %v1024
      %1029 = vst [vmem:[#allocation2 + $0x70] sm:$0xff] %v1027
      %1030 = vst [vmem:[#allocation2 + $0x78] sm:$0xff] %v1028
      %1031 = vrot.lane.b32.xlu0 %v907, 111
      %v1032 = vpop.permute.xlu0 %1031
      %1033 = vrot.lane.b32.xlu0 %v908, 111
      %v1034 = vpop.permute.xlu0 %1033
      %v1035 = vsel %vm709, %v1032, %v1034
      %v1036 = vsel %vm709, %v1034, %v1032
      %v1037 = vld [vmem:[%s712] ss:$8 sm:$0x3]
      %v1039 = vperm.slane %v1037, 0
      %v1040 = vperm.slane %v1037, 1
      %v1043 = vmul.f32 %v1035, %v1039
      %v1044 = vmul.f32 %v1036, %v1040
      %1045 = vst [vmem:[#allocation2 + $0x80] sm:$0xff] %v1043
      %1046 = vst [vmem:[#allocation2 + $0x88] sm:$0xff] %v1044
      %v1047 = vld [vmem:[#allocation2] sm:$0xff]
      %v1048 = vld [vmem:[#allocation2 + $0x8] sm:$0xff]
      %v1049 = vld [vmem:[#allocation2 + $0x10] sm:$0xff]
      %v1050 = vld [vmem:[#allocation2 + $0x18] sm:$0xff]
      %v1051 = vld [vmem:[#allocation2 + $0x20] sm:$0xff]
      %v1052 = vld [vmem:[#allocation2 + $0x28] sm:$0xff]
      %v1053 = vld [vmem:[#allocation2 + $0x30] sm:$0xff]
      %v1054 = vld [vmem:[#allocation2 + $0x38] sm:$0xff]
      %v1055 = vld [vmem:[#allocation2 + $0x40] sm:$0xff]
      %v1056 = vld [vmem:[#allocation2 + $0x48] sm:$0xff]
      %v1057 = vld [vmem:[#allocation2 + $0x50] sm:$0xff]
      %v1058 = vld [vmem:[#allocation2 + $0x58] sm:$0xff]
      %v1059 = vld [vmem:[#allocation2 + $0x60] sm:$0xff]
      %v1060 = vld [vmem:[#allocation2 + $0x68] sm:$0xff]
      %v1061 = vld [vmem:[#allocation2 + $0x70] sm:$0xff]
      %v1062 = vld [vmem:[#allocation2 + $0x78] sm:$0xff]
      %v1063 = vld [vmem:[#allocation2 + $0x80] sm:$0xff]
      %v1064 = vld [vmem:[#allocation2 + $0x88] sm:$0xff]
      %v1065 = vld [vmem:[%s9] sm:$0xff]
      %v1066 = vld [vmem:[%s10] sm:$0xff]
      %1068 = vset.pattern.permute.xlu0 0
      %1069 = vperm.xlu0 %1068, %v1066
      %v1070 = vpop.permute.xlu0 %1069
      %vm1072 = vcmask 588800
      %v1074 = vsel %vm1072, %v1065, 0
      %1076 = vmatpush.msra.mxu0 0.0
      %1077 = vmatpush.msra.mxu0 0.0
      %1078 = vmatpush.msra.mxu0 0.0
      %1079 = vmatpush.msra.mxu0 0.0
      %1080 = vmatpush.msra.mxu0 0.0
      %1081 = vmatpush.msra.mxu0 0.0
      %1082 = vmatpush.msra.mxu0 0.0
      %1083 = vmatpush.msra.mxu0 %v1063
      %1084 = vmatpush.msra.mxu0 %v1061
      %1085 = vmatpush.msra.mxu0 %v1059
      %1086 = vmatpush.msra.mxu0 %v1057
      %1087 = vmatpush.msra.mxu0 %v1055
      %1088 = vmatpush.msra.mxu0 %v1053
      %1089 = vmatpush.msra.mxu0 %v1051
      %1090 = vmatpush.msra.mxu0 %v1049
      %1091 = vmatpush.msra.mxu0 %v1047
      %1092 = vmatmul.f32.gmra.mxu0 %v1074
      %v1093 = vpop.f32.mrf.mxu0
      %v1094 = vadd.f32 %v1070, %v1093
      %1095 = vdwg.mxu0
      %1096 = vmatpush.msra.mxu0 0.0
      %1097 = vmatpush.msra.mxu0 0.0
      %1098 = vmatpush.msra.mxu0 0.0
      %1099 = vmatpush.msra.mxu0 0.0
      %1100 = vmatpush.msra.mxu0 0.0
      %1101 = vmatpush.msra.mxu0 0.0
      %1102 = vmatpush.msra.mxu0 0.0
      %1103 = vmatpush.msra.mxu0 %v1064
      %1104 = vmatpush.msra.mxu0 %v1062
      %1105 = vmatpush.msra.mxu0 %v1060
      %1106 = vmatpush.msra.mxu0 %v1058
      %1107 = vmatpush.msra.mxu0 %v1056
      %1108 = vmatpush.msra.mxu0 %v1054
      %1109 = vmatpush.msra.mxu0 %v1052
      %1110 = vmatpush.msra.mxu0 %v1050
      %1111 = vmatpush.msra.mxu0 %v1048
      %1112 = vmatmul.f32.gmra.mxu0 %v1074
      %v1113 = vpop.f32.mrf.mxu0
      %v1114 = vadd.f32 %v1070, %v1113
      %1115 = vdwg.mxu0
      %v1116 = vld [vmem:[%s11] sm:$0xff]
      %v1117 = vld [vmem:[%s12] sm:$0xff]
      %v1118 = vadd.f32 %v1094, %v1114
      %1119 = vadd.xlane.f32.xlu0 %v1118
      %v1120 = vpop.xlane.xlu0 %1119
      %v1121 = vmul.f32 %v1120, %v817
      %v1122 = vsub.f32 %v1094, %v1121
      %v1123 = vsub.f32 %v1114, %v1121
      %v1124 = vmul.f32 %v1122, %v1122
      %v1125 = vmul.f32 %v1123, %v1123
      %v1126 = vadd.f32 %v1124, %v1125
      %1127 = vadd.xlane.f32.xlu0 %v1126
      %v1128 = vpop.xlane.xlu0 %1127
      %v1129 = vmul.f32 %v1128, %v817
      %v1130 = vadd.f32 %v1129, 1e-05
      %v1131 = vrsqrt.pop %v1130
      %v1132 = vmul.f32 %v1131, %v1130
      %v1133 = vmul.f32 %v1132, %v1131
      %v1134 = vmul.f32 0.5, %v1133
      %v1135 = vsub.f32 1.5, %v1134
      %v1136 = vmul.f32 %v1131, %v1135
      %vm1137 = vweird.f32 %v1130
      %vm1138 = vweird.f32 %v1131
      %vm1139 = vmor %vm1137, %vm1138
      %v1140 = vsel %vm1139, %v1131, %v1136
      %v1141 = vmul.f32 %v1122, %v1140
      %v1142 = vmul.f32 %v1123, %v1140
      %1144 = vset.pattern.permute.xlu0 0
      %1145 = vperm.xlu0 %1144, %v1116
      %v1146 = vpop.permute.xlu0 %1145
      %v1148 = vmul.f32 %v1141, %v1146
      %v1149 = vmul.f32 %v1142, %v1146
      %1151 = vset.pattern.permute.xlu0 0
      %1152 = vperm.xlu0 %1151, %v1117
      %v1153 = vpop.permute.xlu0 %1152
      %v1155 = vadd.f32 %v1148, %v1153
      %v1156 = vadd.f32 %v1149, %v1153
      %v1157 = vxor.u32 %v1155, 2147483648
      %v1158 = vxor.u32 %v1156, 2147483648
      %v1159 = vmul.f32 %v1157, 1.442695
      %v1160 = vpow.pop %v1159
      %v1161 = vmul.f32 %v1158, 1.442695
      %v1162 = vpow.pop %v1161
      %v1163 = vadd.f32 %v1160, 1.0
      %v1164 = vadd.f32 %v1162, 1.0
      %v1165 = vrcp.pop %v1163
      %v1166 = vmul.f32 %v1163, %v1165
      %v1167 = vsub.f32 1.0, %v1166
      %v1168 = vmul.f32 %v1165, %v1167
      %v1169 = vadd.f32 %v1165, %v1168
      %vm1170 = vweird.f32 %v1163
      %vm1171 = vweird.f32 %v1165
      %vm1172 = vmor %vm1170, %vm1171
      %v1173 = vsel %vm1172, %v1165, %v1169
      %v1174 = vand.u32 2147483647, %v1163
      %vm1175 = vcmp.eq.f32.partialorder %v1174, 8.507059e+37
      %v1176 = vand.u32 %v1163, 2147483648
      %v1177 = vor.u32 1.1754944e-38, %v1176
      %v1178 = vsel %vm1175, %v1177, %v1173
      %v1179 = vmul.f32 1.0, %v1178
      %v1180 = vrcp.pop %v1164
      %v1181 = vmul.f32 %v1164, %v1180
      %v1182 = vsub.f32 1.0, %v1181
      %v1183 = vmul.f32 %v1180, %v1182
      %v1184 = vadd.f32 %v1180, %v1183
      %vm1185 = vweird.f32 %v1164
      %vm1186 = vweird.f32 %v1180
      %vm1187 = vmor %vm1185, %vm1186
      %v1188 = vsel %vm1187, %v1180, %v1184
      %v1189 = vand.u32 2147483647, %v1164
      %vm1190 = vcmp.eq.f32.partialorder %v1189, 8.507059e+37
      %v1191 = vand.u32 %v1164, 2147483648
      %v1192 = vor.u32 1.1754944e-38, %v1191
      %v1193 = vsel %vm1190, %v1192, %v1188
      %v1194 = vmul.f32 1.0, %v1193
      %v1195 = vmul.f32 %v1155, %v1179
      %v1196 = vmul.f32 %v1156, %v1194
      %v1197 = vadd.f32 %v1195, %v781
      %v1198 = vadd.f32 %v1196, %v804
      %1199 = vst [vmem:[%s454] sm:$0xff] %v1197
      %1200 = vst [vmem:[%s454 + $0x8] sm:$0xff] %v1198
      %p1201 = scmp.lt.s32.totalorder %s24, 1
      %s1202 = scalar_select %p1201, %s24, 1
      %s1203 = smul.addr %s1202, 2
      %s1204 = smul.addr %s1203, 8
      %s1205 = scalar_lea.vmem %s13, %s1204
      // Predicated region
      $region73: #{resnet_block_forward.1} parent=71 // pred_check
        %p1206 = pneg %p325
      $region74: #{resnet_block_forward.1} parent=71 // pred_check_branch
        %1208 = sbr.rel (%p1206) target = $region76
      $region75: #{resnet_block_forward.1} parent=71 // pred_region
        _
      $region76: #{resnet_block_forward.1} parent=71 // pred_fallthru
        _
    $region72: #{resnet_block_forward.1} parent=5 // pred_fallthru
      _
    %p1209 = scmp.le.s32.totalorder 2, %s19
    // Predicated region
    $region77: #{resnet_block_forward.1} parent=5 // pred_check
      %p1210 = pneg %p1209
    $region78: #{resnet_block_forward.1} parent=5 // pred_check_branch
      %1212 = sbr.rel (%p1210) target = $region80
    $region79: #{resnet_block_forward.1} parent=5 // pred_region
      %s1213 = ssub.s32 %s19, 2
      // Predicated region
      $region81: #{resnet_block_forward.1} parent=79 // pred_check
        %p1214 = pneg %p331
      $region82: #{resnet_block_forward.1} parent=79 // pred_check_branch
        %1216 = sbr.rel (%p1214) target = $region84
      $region83: #{resnet_block_forward.1} parent=79 // pred_region
        %p1217 = scmp.lt.s32.totalorder %s25, 1
        %s1218 = scalar_select %p1217, %s25, 1
        %s1219 = smul.addr %s1218, 2
        %s1220 = smul.addr %s1219, 8
        %s1221 = scalar_lea.vmem %s13, %s1220
      $region84: #{resnet_block_forward.1} parent=79 // pred_fallthru
        _
    $region80: #{resnet_block_forward.1} parent=5 // pred_fallthru
      _
  $region6: #{resnet_block_forward.1} parent=0 // loop_footer
    %s23 = sadd.s32 1, %s19
  $region7: #{resnet_block_forward.1} parent=0 // loop_footer_branch
    %18 = sbr.rel target = $region3
  $region8: #{resnet_block_forward.1} parent=0 // loop_exit
    _

</llo_original>
